<compile_context>
chip_gen: v6e
topology: v6e:2x2x1
jax: 0.10.0
libtpu: 0.0.40
codegen_flags: <defaults>
</compile_context>

<pallas_src>
import functools
import math

import jax
import jax.numpy as jnp
from jax.experimental import pallas as pl
from jax.experimental.pallas import tpu as pltpu

_VMEM_LIMIT = 32 * 1024 * 1024      # scoped VMEM limit (headroom under v7x 64 MiB)
_STAGE_TILE_ROWS = 1024             # target flat rows per fused-stage grid step
_SQRT_2_OVER_PI = math.sqrt(2.0 / math.pi)


def _round_up(x, m):
    return ((x + m - 1) // m) * m


def _cp(sem):
    return pltpu.CompilerParams(dimension_semantics=sem, vmem_limit_bytes=_VMEM_LIMIT)


# ----------------------------------------------------------------------------
# in-kernel math helpers
# ----------------------------------------------------------------------------
def _gelu(x):
    # tanh-form GELU: transcendental goes to the EUP slot.
    return 0.5 * x * (1.0 + jnp.tanh(_SQRT_2_OVER_PI * (x + 0.044715 * x * x * x)))


def _apply_act(x, act):
    if act == "none":
        return x
    if act == "gelu":
        return _gelu(x)
    if act == "relu":
        return jnp.maximum(x, 0.0)
    if act == "sigmoid":
        return 1.0 / (1.0 + jnp.exp(-x))
    raise ValueError(f"unknown act {act}")


# ----------------------------------------------------------------------------
# Pallas kernel 1: fused, row-tiled distillation stage
#   slab = gelu(x @ [Wd_0 | Wd_1 ...] + b_heads)          (lane-dense head slab)
#   r    = gelu(dw3x3(x @ Wpw) + bdw [+ x])               (BSConvU + residual + act)
# Vertical halo = two extra one-image-row blocks of x (clamped index_map, masked at image
# top/bottom).  Horizontal +-1 taps via a small VMEM scratch; left/right columns masked
# with an in-kernel iota.
# ----------------------------------------------------------------------------
def _fused_stage_kernel(*refs, M, W, nc, Dh, n_tiles, with_halo, with_res):
    it = iter(refs)
    x_ref = next(it)
    xt_ref = next(it) if with_halo else None
    xb_ref = next(it) if with_halo else None
    w_all_ref = next(it)
    bh_ref = next(it) if Dh > 0 else None
    dww_ref = next(it)
    dwb_ref = next(it)
    slab_ref = next(it) if Dh > 0 else None
    r_ref = next(it)
    scr_l = next(it)
    scr_r = next(it)

    x = x_ref[...]                                                 # (M, Cin) bf16
    w_all = w_all_ref[...]                                         # (Cin, nc+Dh) bf16
    full = jnp.dot(x, w_all, preferred_element_type=jnp.float32)   # (M, nc+Dh) f32

    if Dh > 0:
        slab_ref[...] = _gelu(full[:, nc:nc + Dh] + bh_ref[...]).astype(slab_ref.dtype)

    pw = full[:, 0:nc]                                             # pointwise result (f32)

    if with_halo:
        i = pl.program_id(1)
        top_ok = (i > 0).astype(jnp.float32)
        bot_ok = (i < n_tiles - 1).astype(jnp.float32)
        pw_top = jnp.dot(xt_ref[...], w_all,
                         preferred_element_type=jnp.float32)[:, 0:nc] * top_ok
        pw_bot = jnp.dot(xb_ref[...], w_all,
                         preferred_element_type=jnp.float32)[:, 0:nc] * bot_ok
    else:
        pw_top = jnp.zeros((W, nc), jnp.float32)
        pw_bot = jnp.zeros((W, nc), jnp.float32)

    # vertically shifted views (sublane-aligned when W % 8 == 0)
    t0 = jnp.concatenate([pw_top, pw[:M - W, :]], axis=0)          # image row above
    t1 = pw                                                        # same image row
    t2 = jnp.concatenate([pw[W:, :], pw_bot], axis=0)              # image row below

    wdw = dww_ref[...].astype(jnp.float32)                         # (9, nc), t = 3*dy + dx
    acc_l = t0 * wdw[0:1] + t1 * wdw[3:4] + t2 * wdw[6:7]          # dx = -1 taps
    acc_c = t0 * wdw[1:2] + t1 * wdw[4:5] + t2 * wdw[7:8]          # dx =  0 taps
    acc_r = t0 * wdw[2:3] + t1 * wdw[5:6] + t2 * wdw[8:9]          # dx = +1 taps

    # horizontal +-1 shift: aligned scratch store + one unaligned load each; the wrap rows
    # only reach masked columns, so the scratch pad rows never need initialisation.
    scr_l[8:8 + M, :] = acc_l
    scr_r[8:8 + M, :] = acc_r
    left = scr_l[7:7 + M, :]
    right = scr_r[9:9 + M, :]

    rows = jax.lax.broadcasted_iota(jnp.int32, (M, nc), 0)
    if W & (W - 1) == 0:
        col = jnp.bitwise_and(rows, W - 1)
    else:
        col = rows % W   # TODO(synk): strength-reduce for non-power-of-two W
    acc = acc_c + jnp.where(col != 0, left, 0.0) + jnp.where(col != W - 1, right, 0.0)

    acc = acc + dwb_ref[...]
    if with_res:
        acc = acc + x.astype(jnp.float32)
    r_ref[...] = _gelu(acc).astype(r_ref.dtype)


def _pick_stage_tile(H, W, tile_rows=None):
    """Image-rows per grid step and whether the halo path is used."""
    if W % 8 != 0:
        return H, False     # TODO(synk): general-W fallback = one whole image per step
    target = tile_rows if tile_rows is not None else _STAGE_TILE_ROWS
    th = 1
    for cand in range(H, 0, -1):
        if H % cand == 0 and cand * W <= target:
            th = cand
            break
    if th >= H:
        return H, False
    return th, True


def _fused_stage(x3, heads, pw_w, dw_w, dw_b, *, H, W, with_res, tile_rows=None):
    """x3: (B, H*W, Cin) bf16.  heads: list of (w (Cin,dch) bf16, b (1,dch) f32)."""
    B, HW, Cin = x3.shape
    assert HW == H * W
    nc = pw_w.shape[1]
    Dh = sum(int(w.shape[1]) for w, _ in heads)

    TH, with_halo = _pick_stage_tile(H, W, tile_rows)
    n_tiles = H // TH
    M = TH * W

    if heads:
        w_all = jnp.concatenate([pw_w] + [w for (w, _) in heads], axis=1)
        b_h = jnp.concatenate([b for (_, b) in heads], axis=1)
    else:
        w_all = pw_w
        b_h = None

    in_specs = [pl.BlockSpec((None, M, Cin), lambda b, i: (b, i, 0))]
    args = [x3]
    if with_halo:
        in_specs.append(pl.BlockSpec(
            (None, W, Cin), lambda b, i: (b, jnp.maximum(i * TH - 1, 0), 0)))
        in_specs.append(pl.BlockSpec(
            (None, W, Cin), lambda b, i: (b, jnp.minimum(i * TH + TH, H - 1), 0)))
        args += [x3, x3]
    in_specs.append(pl.BlockSpec((Cin, nc + Dh), lambda b, i: (0, 0)))
    args.append(w_all)
    if Dh > 0:
        in_specs.append(pl.BlockSpec((1, Dh), lambda b, i: (0, 0)))
        args.append(b_h)
    in_specs += [pl.BlockSpec((9, nc), lambda b, i: (0, 0)),
                 pl.BlockSpec((1, nc), lambda b, i: (0, 0))]
    args += [dw_w, dw_b]

    out_specs = []
    out_shapes = []
    if Dh > 0:
        out_specs.append(pl.BlockSpec((None, M, Dh), lambda b, i: (b, i, 0)))
        out_shapes.append(jax.ShapeDtypeStruct((B, HW, Dh), jnp.bfloat16))
    out_specs.append(pl.BlockSpec((None, M, nc), lambda b, i: (b, i, 0)))
    out_shapes.append(jax.ShapeDtypeStruct((B, HW, nc), jnp.bfloat16))

    kern = functools.partial(_fused_stage_kernel, M=M, W=W, nc=nc, Dh=Dh,
                             n_tiles=n_tiles, with_halo=with_halo, with_res=with_res)
    outs = pl.pallas_call(
        kern,
        grid=(B, n_tiles),
        in_specs=in_specs,
        out_specs=tuple(out_specs) if Dh > 0 else out_specs[0],
        out_shape=tuple(out_shapes) if Dh > 0 else out_shapes[0],
        scratch_shapes=[pltpu.VMEM((M + 16, nc), jnp.float32),
                        pltpu.VMEM((M + 16, nc), jnp.float32)],
        compiler_params=_cp(("parallel", "parallel")),
    )(*args)
    if Dh > 0:
        return outs[0], outs[1]
    return None, outs


# ----------------------------------------------------------------------------
# Pallas kernel 2: K-split pointwise matmul
#   y = act(sum_i x_i @ w_i + b [+ residual])
# 1x1 convs over (virtually) channel-concatenated inputs without materializing the concat.
# ----------------------------------------------------------------------------
def _ksplit_kernel(*refs, n_in, act, with_res):
    xs = refs[0:n_in]
    ws = refs[n_in:2 * n_in]
    b_ref = refs[2 * n_in]
    idx = 2 * n_in + 1
    res_ref = None
    if with_res:
        res_ref = refs[idx]
        idx += 1
    o_ref = refs[idx]

    acc = jnp.dot(xs[0][...], ws[0][...], preferred_element_type=jnp.float32)
    for i in range(1, n_in):
        acc = acc + jnp.dot(xs[i][...], ws[i][...], preferred_element_type=jnp.float32)
    acc = acc + b_ref[...]
    if with_res:
        acc = acc + res_ref[...].astype(jnp.float32)
    o_ref[...] = _apply_act(acc, act).astype(o_ref.dtype)


def _row_tile(M):
    for cand in (1024, 512, 256, 128):
        if M >= cand and M % cand == 0:
            return cand, M
    if M <= 1024:
        mp = _round_up(M, 8)
        return mp, mp
    mp = _round_up(M, 512)
    return 512, mp


def _ksplit_conv(xs, ws, b, act="none", residual=None, out_dtype=jnp.bfloat16):
    n_in = len(xs)
    M = xs[0].shape[0]
    Cout = ws[0].shape[1]
    tm, Mp = _row_tile(M)

    def _pad_rows(a):
        if a is None or Mp == M:
            return a
        return jnp.pad(a, ((0, Mp - M), (0, 0)))

    xs = [_pad_rows(x) for x in xs]
    residual = _pad_rows(residual)

    in_specs = [pl.BlockSpec((tm, x.shape[1]), lambda i: (i, 0)) for x in xs]
    in_specs += [pl.BlockSpec((w.shape[0], Cout), lambda i: (0, 0)) for w in ws]
    in_specs += [pl.BlockSpec((1, Cout), lambda i: (0, 0))]
    args = list(xs) + list(ws) + [b]
    if residual is not None:
        in_specs.append(pl.BlockSpec((tm, Cout), lambda i: (i, 0)))
        args.append(residual)

    out = pl.pallas_call(
        functools.partial(_ksplit_kernel, n_in=n_in, act=act,
                          with_res=residual is not None),
        grid=(Mp // tm,),
        in_specs=in_specs,
        out_specs=pl.BlockSpec((tm, Cout), lambda i: (i, 0)),
        out_shape=jax.ShapeDtypeStruct((Mp, Cout), out_dtype),
        compiler_params=_cp(("parallel",)),
    )(*args)
    return out[:M] if Mp != M else out


def _conv1x1(x2d, w, b, act="none", residual=None, out_dtype=jnp.bfloat16):
    return _ksplit_conv([x2d], [w], b, act=act, residual=residual, out_dtype=out_dtype)


# ----------------------------------------------------------------------------
# Pallas kernel 3: ESA head (conv1 + conv_f fused, one read of x)
# ----------------------------------------------------------------------------
def _esa_head_kernel(x_ref, w1_ref, b1_ref, wf_ref, bf_ref, c1_ref, cf_ref):
    c1 = jnp.dot(x_ref[...], w1_ref[...], preferred_element_type=jnp.float32) + b1_ref[...]
    c1_ref[...] = c1.astype(c1_ref.dtype)
    cf = jnp.dot(c1.astype(jnp.bfloat16), wf_ref[...],
                 preferred_element_type=jnp.float32) + bf_ref[...]
    cf_ref[...] = cf.astype(cf_ref.dtype)


def _esa_head(x2d, w1, b1, wf, bf):
    M, nc = x2d.shape
    f = w1.shape[1]
    tm, Mp = _row_tile(M)
    xp = x2d if Mp == M else jnp.pad(x2d, ((0, Mp - M), (0, 0)))
    c1, cf = pl.pallas_call(
        _esa_head_kernel,
        grid=(Mp // tm,),
        in_specs=[pl.BlockSpec((tm, nc), lambda i: (i, 0)),
                  pl.BlockSpec((nc, f), lambda i: (0, 0)),
                  pl.BlockSpec((1, f), lambda i: (0, 0)),
                  pl.BlockSpec((f, f), lambda i: (0, 0)),
                  pl.BlockSpec((1, f), lambda i: (0, 0))],
        out_specs=(pl.BlockSpec((tm, f), lambda i: (i, 0)),
                   pl.BlockSpec((tm, f), lambda i: (i, 0))),
        out_shape=(jax.ShapeDtypeStruct((Mp, f), jnp.bfloat16),
                   jax.ShapeDtypeStruct((Mp, f), jnp.bfloat16)),
        compiler_params=_cp(("parallel",)),
    )(xp, w1, b1, wf, bf)
    return c1[:M], cf[:M]


# ----------------------------------------------------------------------------
# Pallas kernel 4: ESA sigmoid gating + CCA channel statistics
#   out = x * sigmoid((c3 + cf) @ W4 + b4);   stats[b] = [sum_hw out, sum_hw out^2]
# stats accumulate across the row-tile grid axis (output accumulator, 'arbitrary' axis).
# ----------------------------------------------------------------------------
def _esa_gate_cca_kernel(x_ref, c3_ref, cf_ref, w4_ref, b4_ref, o_ref, stats_ref):
    j = pl.program_id(1)
    s = c3_ref[...] + cf_ref[...]
    logits = jnp.dot(s, w4_ref[...], preferred_element_type=jnp.float32) + b4_ref[...]
    m = 1.0 / (1.0 + jnp.exp(-logits))
    y = x_ref[...].astype(jnp.float32) * m
    o_ref[...] = y.astype(o_ref.dtype)

    s1 = jnp.sum(y, axis=0, keepdims=True)
    s2 = jnp.sum(y * y, axis=0, keepdims=True)

    @pl.when(j == 0)
    def _():
        stats_ref[0:1, :] = s1
        stats_ref[1:2, :] = s2

    @pl.when(j > 0)
    def _():
        stats_ref[0:1, :] = stats_ref[0:1, :] + s1
        stats_ref[1:2, :] = stats_ref[1:2, :] + s2


def _esa_gate_cca(x3, c3, cf3, w4, b4):
    B, HW, nc = x3.shape
    f = c3.shape[2]
    T = HW
    for cand in (2048, 1024, 512, 256, 128, 64, 32, 16, 8):
        if HW % cand == 0:
            T = cand
            break
    n_t = HW // T
    out, stats = pl.pallas_call(
        _esa_gate_cca_kernel,
        grid=(B, n_t),
        in_specs=[pl.BlockSpec((None, T, nc), lambda b, j: (b, j, 0)),
                  pl.BlockSpec((None, T, f), lambda b, j: (b, j, 0)),
                  pl.BlockSpec((None, T, f), lambda b, j: (b, j, 0)),
                  pl.BlockSpec((f, nc), lambda b, j: (0, 0)),
                  pl.BlockSpec((1, nc), lambda b, j: (0, 0))],
        out_specs=(pl.BlockSpec((None, T, nc), lambda b, j: (b, j, 0)),
                   pl.BlockSpec((None, 2, nc), lambda b, j: (b, 0, 0))),
        out_shape=(jax.ShapeDtypeStruct((B, HW, nc), jnp.bfloat16),
                   jax.ShapeDtypeStruct((B, 2, nc), jnp.float32)),
        compiler_params=_cp(("parallel", "arbitrary")),
    )(x3, c3, cf3, w4, b4)
    return out, stats


# ----------------------------------------------------------------------------
# XLA glue for ESA's small downsampled-map 3x3 convs (im2col kept only here)
# ----------------------------------------------------------------------------
def _im2col3(x, stride, padding):
    B, H, W, C = x.shape
    if padding:
        x = jnp.pad(x, ((0, 0), (padding, padding), (padding, padding), (0, 0)))
    Hp, Wp = x.shape[1], x.shape[2]
    Ho = (Hp - 3) // stride + 1
    Wo = (Wp - 3) // stride + 1
    cols = []
    for dy in range(3):
        for dx in range(3):
            cols.append(x[:, dy:dy + stride * (Ho - 1) + 1:stride,
                          dx:dx + stride * (Wo - 1) + 1:stride, :])
    return jnp.concatenate(cols, axis=-1), Ho, Wo


def _conv3x3_same(x4, w9, b, act="none"):
    B, H, W, C = x4.shape
    cols, Ho, Wo = _im2col3(x4, stride=1, padding=1)
    Cout = w9.shape[1]
    y = _conv1x1(cols.reshape(B * Ho * Wo, 9 * C), w9, b, act=act)
    return y.reshape(B, Ho, Wo, Cout)


# ----------------------------------------------------------------------------
# module forwards
# ----------------------------------------------------------------------------
def block_forward(x3, p, H, W, act, residual, extra):
    """Block (ESDB): 3 fused distill+BSConvU stages, 1 BSConvU stage, K-split c5.

    `extra` = optional Susi0-level distilled head folded into stage 1 as a second head.
    Returns (block_out, stage1_head_slab_or_None).
    """
    B, HW, nc = x3.shape
    dc = nc // 2

    heads1 = [(p["c1_d_w"], p["c1_d_b"])]
    if extra is not None:
        heads1.append(extra)
    bs = p["c1_r"]
    slab1, r1 = _fused_stage(x3, heads1, bs["pw_w"], bs["dw_w"], bs["dw_b"],
                             H=H, W=W, with_res=True)
    bs = p["c2_r"]
    slab2, r2 = _fused_stage(r1, [(p["c2_d_w"], p["c2_d_b"])],
                             bs["pw_w"], bs["dw_w"], bs["dw_b"],
                             H=H, W=W, with_res=True)
    bs = p["c3_r"]
    slab3, r3 = _fused_stage(r2, [(p["c3_d_w"], p["c3_d_b"])],
                             bs["pw_w"], bs["dw_w"], bs["dw_b"],
                             H=H, W=W, with_res=True)
    bs = p["c4"]
    _, r4 = _fused_stage(r3, [], bs["pw_w"], bs["dw_w"], bs["dw_b"],
                         H=H, W=W, with_res=False)

    # c5 over the virtual concat [d1, d2, d3, r4] (K-split, no HBM concat).  The Susi-level
    # head that shares slab1 is skipped through zero weight rows (cheap dummy MXU K).
    w5 = p["c5_w"]
    M2 = B * HW
    xs = [slab1.reshape(M2, slab1.shape[2]),
          slab2.reshape(M2, dc),
          slab3.reshape(M2, dc),
          r4.reshape(M2, nc)]
    if extra is not None:
        w0 = jnp.concatenate([w5[0:dc], jnp.zeros((dc, nc), w5.dtype)], axis=0)
    else:
        w0 = w5[0:dc]
    ws = [w0, w5[dc:2 * dc], w5[2 * dc:3 * dc], w5[3 * dc:]]
    res2 = None if residual is None else residual.reshape(M2, nc)
    out = _ksplit_conv(xs, ws, p["c5_b"], act=act, residual=res2).reshape(B, HW, nc)
    return out, (slab1 if extra is not None else None)


def esa_forward(x3, p, H, W):
    B, HW, nc = x3.shape
    f = p["conv1_w"].shape[1]
    x2d = x3.reshape(B * HW, nc)

    c1_, cf = _esa_head(x2d, p["conv1_w"], p["conv1_b"], p["convf_w"], p["convf_b"])
    c1_4 = c1_.reshape(B, H, W, f)

    cols, Ho, Wo = _im2col3(c1_4, stride=2, padding=0)               # stride-2 3x3
    c1 = _conv1x1(cols.reshape(B * Ho * Wo, 9 * f), p["conv2_w"], p["conv2_b"])
    c1 = c1.reshape(B, Ho, Wo, f)

    v_max = jax.lax.reduce_window(c1, jnp.array(-jnp.inf, c1.dtype), jax.lax.max,
                                  (1, 7, 7, 1), (1, 3, 3, 1), "VALID")
    v_range = _conv3x3_same(v_max, p["convmax_w"], p["convmax_b"], act="relu")
    c3 = _conv3x3_same(v_range, p["conv3_w"], p["conv3_b"], act="relu")
    c3 = _conv3x3_same(c3, p["conv3__w"], p["conv3__b"])
    c3 = jax.image.resize(c3.astype(jnp.float32), (B, H, W, f), method="bilinear")
    c3 = c3.astype(jnp.bfloat16)

    out, stats = _esa_gate_cca(x3, c3.reshape(B, HW, f), cf.reshape(B, HW, f),
                               p["conv4_w"], p["conv4_b"])
    return out, stats


def cca_gate(stats, p, HW):
    # IMDN CCALayer: y = contrast(x) + avg_pool(x); gate = sigmoid(fc2(relu(fc1(y))))
    mean = stats[:, 0, :] / float(HW)
    ex2 = stats[:, 1, :] / float(HW)
    var = jnp.maximum(ex2 - mean * mean, 0.0)
    y = mean + jnp.sqrt(var)
    h = jnp.maximum(y @ p["du1_w"].astype(jnp.float32) + p["du1_b"], 0.0)
    g = jax.nn.sigmoid(h @ p["du2_w"].astype(jnp.float32) + p["du2_b"])
    return g                                                         # (B, nc) f32


def susi0_forward(x3f, p, H, W):
    B, HW, nc = x3f.shape
    dc = nc // 2
    x3 = x3f.astype(jnp.bfloat16)

    r1, d1 = block_forward(x3, p["c1_r"], H, W, "gelu", x3, (p["c1_d_w"], p["c1_d_b"]))
    r2, d2 = block_forward(r1, p["c2_r"], H, W, "gelu", r1, (p["c2_d_w"], p["c2_d_b"]))
    r3, d3 = block_forward(r2, p["c3_r"], H, W, "gelu", r2, (p["c3_d_w"], p["c3_d_b"]))
    # the reference Susi0 forward re-uses c1_r / c2_r / c3_r for stages 4-6
    r4, d4 = block_forward(r3, p["c1_r"], H, W, "gelu", r3, (p["c4_d_w"], p["c4_d_b"]))
    r5, d5 = block_forward(r4, p["c2_r"], H, W, "gelu", r4, (p["c5_d_w"], p["c5_d_b"]))
    r6, d6 = block_forward(r5, p["c3_r"], H, W, "gelu", r5, (p["c6_d_w"], p["c6_d_b"]))
    r7, _ = block_forward(r6, p["c4"], H, W, "gelu", None, None)

    # Susi0 c5 over the virtual concat [d1..d6, r7]; the Susi heads live in the second half
    # of each block's stage-1 slab and are selected with zero-padded weight chunks.
    w5 = p["c5_w"]
    zeros_dc = jnp.zeros((dc, nc), w5.dtype)
    xs, ws = [], []
    for i, slab in enumerate((d1, d2, d3, d4, d5, d6)):
        xs.append(slab.reshape(B * HW, slab.shape[2]))
        ws.append(jnp.concatenate([zeros_dc, w5[i * dc:(i + 1) * dc]], axis=0))
    xs.append(r7.reshape(B * HW, nc))
    ws.append(w5[6 * dc:])
    out = _ksplit_conv(xs, ws, p["c5_b"], act="none").reshape(B, HW, nc)

    esa_out, stats = esa_forward(out, p["esa"], H, W)
    g = cca_gate(stats, p["cca"], HW)
    return esa_out.astype(jnp.float32) * g[:, None, :] + x3f


def susi0_apply(x_nchw, params):
    x = jnp.transpose(x_nchw, (0, 2, 3, 1))                          # NCHW -> NHWC
    B, H, W, C = x.shape
    y3 = susi0_forward(x.reshape(B, H * W, C), params, H, W)
    return jnp.transpose(y3.reshape(B, H, W, C), (0, 3, 1, 2))       # NHWC -> NCHW


# ----------------------------------------------------------------------------
# pure-jnp reference for one fused stage (used by the self-check only)
# ----------------------------------------------------------------------------
def _ref_fused_stage(x3, heads, pw_w, dw_w, dw_b, H, W, with_res):
    B, HW, C = x3.shape
    nc = pw_w.shape[1]
    xf = x3.astype(jnp.float32).reshape(B, H, W, C)
    pw = jnp.einsum("bhwc,cd->bhwd", xf, pw_w.astype(jnp.float32))
    pwp = jnp.pad(pw, ((0, 0), (1, 1), (1, 1), (0, 0)))
    k = dw_w.reshape(3, 3, nc)
    acc = jnp.zeros_like(pw)
    for dy in range(3):
        for dx in range(3):
            acc = acc + pwp[:, dy:dy + H, dx:dx + W, :] * k[dy, dx]
    acc = acc + dw_b.reshape(1, 1, 1, nc)
    if with_res:
        acc = acc + xf
    r = _gelu(acc).reshape(B, HW, nc)
    slabs = []
    for (w, b) in heads:
        y = jnp.einsum("bhwc,cd->bhwd", xf, w.astype(jnp.float32)) + b.reshape(1, 1, 1, -1)
        slabs.append(_gelu(y).reshape(B, HW, w.shape[1]))
    slab = jnp.concatenate(slabs, axis=2) if slabs else None
    return slab, r


# ----------------------------------------------------------------------------
# deterministic parameter init
# ----------------------------------------------------------------------------
class KeyGen:
    def __init__(self, key):
        self.key = key

    def __call__(self):
        self.key, sub = jax.random.split(self.key)
        return sub


def _init(key, shape, scale=0.05):
    return scale * jax.random.normal(key, shape, jnp.float32)


def init_linear(kg, cin, cout):
    return (_init(kg(), (cin, cout)).astype(jnp.bfloat16),
            _init(kg(), (1, cout), 0.02))


def init_bsconv(kg, cin, cout):
    return {"pw_w": _init(kg(), (cin, cout)).astype(jnp.bfloat16),   # pw bias=False
            "dw_w": _init(kg(), (9, cout)),                          # f32 (VPU path)
            "dw_b": _init(kg(), (1, cout), 0.02)}


def init_conv3x3(kg, cin, cout):
    return (_init(kg(), (9 * cin, cout)).astype(jnp.bfloat16),
            _init(kg(), (1, cout), 0.02))


def init_block(kg, nc):
    dc = nc // 2
    p = {}
    p["c1_d_w"], p["c1_d_b"] = init_linear(kg, nc, dc)
    p["c2_d_w"], p["c2_d_b"] = init_linear(kg, nc, dc)
    p["c3_d_w"], p["c3_d_b"] = init_linear(kg, nc, dc)
    p["c1_r"] = init_bsconv(kg, nc, nc)
    p["c2_r"] = init_bsconv(kg, nc, nc)
    p["c3_r"] = init_bsconv(kg, nc, nc)
    p["c4"] = init_bsconv(kg, nc, nc)
    p["c5_w"], p["c5_b"] = init_linear(kg, dc * 3 + nc, nc)
    return p


def init_esa(kg, nc):
    f = nc // 4
    p = {}
    p["conv1_w"], p["conv1_b"] = init_linear(kg, nc, f)
    p["convf_w"], p["convf_b"] = init_linear(kg, f, f)
    p["conv2_w"], p["conv2_b"] = init_conv3x3(kg, f, f)
    p["convmax_w"], p["convmax_b"] = init_conv3x3(kg, f, f)
    p["conv3_w"], p["conv3_b"] = init_conv3x3(kg, f, f)
    p["conv3__w"], p["conv3__b"] = init_conv3x3(kg, f, f)
    p["conv4_w"], p["conv4_b"] = init_linear(kg, f, nc)
    return p


def init_cca(kg, nc, reduction=16):
    hid = max(nc // reduction, 1)
    p = {}
    p["du1_w"], p["du1_b"] = init_linear(kg, nc, hid)
    p["du2_w"], p["du2_b"] = init_linear(kg, hid, nc)
    return p


def init_susi0(kg, nc):
    dc = nc // 2
    p = {}
    for name in ("c1_d", "c2_d", "c3_d", "c4_d", "c5_d", "c6_d"):
        p[name + "_w"], p[name + "_b"] = init_linear(kg, nc, dc)
    p["c1_r"] = init_block(kg, nc)
    p["c2_r"] = init_block(kg, nc)
    p["c3_r"] = init_block(kg, nc)
    p["c4"] = init_block(kg, nc)
    p["c5_w"], p["c5_b"] = init_linear(kg, dc * 6 + nc, nc)
    p["esa"] = init_esa(kg, nc)
    p["cca"] = init_cca(kg, nc)
    return p


# ----------------------------------------------------------------------------
if __name__ == "__main__":
    nc, B, H, W = 32, 2, 16, 16
    kg = KeyGen(jax.random.PRNGKey(0))
    params = init_susi0(kg, nc)
    x = jax.random.normal(kg(), (B, nc, H, W), jnp.float32)   # NCHW, like PyTorch

    # --- self-check of the row-tiled (halo) fused stage against a pure-jnp reference ---
    bs = init_bsconv(kg, nc, nc)
    hw_, hb_ = init_linear(kg, nc, nc // 2)
    xs3 = jax.random.normal(kg(), (1, H * W, nc), jnp.float32).astype(jnp.bfloat16)
    run_stage = jax.jit(functools.partial(_fused_stage, H=H, W=W, with_res=True,
                                          tile_rows=8 * W))           # forces 2 row tiles
    slab_got, r_got = run_stage(xs3, [(hw_, hb_)], bs["pw_w"], bs["dw_w"], bs["dw_b"])
    slab_want, r_want = _ref_fused_stage(xs3, [(hw_, hb_)], bs["pw_w"], bs["dw_w"],
                                         bs["dw_b"], H, W, True)
    assert bool(jnp.allclose(r_got.astype(jnp.float32), r_want, atol=5e-2, rtol=5e-2))
    assert bool(jnp.allclose(slab_got.astype(jnp.float32), slab_want, atol=5e-2, rtol=5e-2))

    # --- full forward ---
    y = jax.jit(susi0_apply)(x, params)
    y = jax.block_until_ready(y)

    assert y.shape == (B, nc, H, W) and y.dtype == jnp.float32
    assert bool(jnp.all(jnp.isfinite(y)))
    print("KERNEL_OK")
</pallas_src>

<mosaic_0001>
module attributes {stable_mosaic.version = 11 : i64} {
  func.func @_fused_stage_kernel(%arg0: i32, %arg1: i32, %arg2: memref<1x128x32xbf16, #tpu.memory_space<vmem>>, %arg3: memref<1x16x32xbf16, #tpu.memory_space<vmem>>, %arg4: memref<1x16x32xbf16, #tpu.memory_space<vmem>>, %arg5: memref<32x48xbf16, #tpu.memory_space<vmem>>, %arg6: memref<1x16xf32, #tpu.memory_space<vmem>>, %arg7: memref<9x32xf32, #tpu.memory_space<vmem>>, %arg8: memref<1x32xf32, #tpu.memory_space<vmem>>, %arg9: memref<1x128x16xbf16, #tpu.memory_space<vmem>>, %arg10: memref<1x128x32xbf16, #tpu.memory_space<vmem>>, %arg11: memref<144x32xf32, #tpu.memory_space<vmem>>, %arg12: memref<144x32xf32, #tpu.memory_space<vmem>>) attributes {dimension_semantics = [#tpu.dimension_semantics<parallel>, #tpu.dimension_semantics<parallel>], iteration_bounds = array<i64: 1, 2>, scalar_prefetch = 0 : i64, scratch_operands = 2 : i64, tpu.core_type = #tpu.core_type<tc>, window_params = [{transform_indices = @transform_0, window_bounds = array<i64: 1, 128, 32>}, {transform_indices = @transform_1, window_bounds = array<i64: 1, 16, 32>}, {transform_indices = @transform_2, window_bounds = array<i64: 1, 16, 32>}, {pipeline_mode = #tpu.pipeline_mode<synchronous>, transform_indices = @transform_3, window_bounds = array<i64: 32, 48>}, {pipeline_mode = #tpu.pipeline_mode<synchronous>, transform_indices = @transform_4, window_bounds = array<i64: 1, 16>}, {pipeline_mode = #tpu.pipeline_mode<synchronous>, transform_indices = @transform_5, window_bounds = array<i64: 9, 32>}, {pipeline_mode = #tpu.pipeline_mode<synchronous>, transform_indices = @transform_6, window_bounds = array<i64: 1, 32>}, {transform_indices = @transform_7, window_bounds = array<i64: 1, 128, 16>}, {transform_indices = @transform_8, window_bounds = array<i64: 1, 128, 32>}]} {
    %c0 = arith.constant 0 : index
    %c0_0 = arith.constant 0 : index
    %c0_1 = arith.constant 0 : index
    %0 = vector.load %arg2[%c0, %c0_0, %c0_1] : memref<1x128x32xbf16, #tpu.memory_space<vmem>>, vector<1x128x32xbf16>
    %1 = vector.shape_cast %0 : vector<1x128x32xbf16> to vector<128x32xbf16>
    %c0_2 = arith.constant 0 : index
    %c0_3 = arith.constant 0 : index
    %2 = vector.load %arg5[%c0_2, %c0_3] : memref<32x48xbf16, #tpu.memory_space<vmem>>, vector<32x48xbf16>
    %cst = arith.constant dense<0.000000e+00> : vector<128x48xf32>
    %3 = tpu.matmul %1, %2, %cst {dimension_numbers = #tpu.dot_dimension_numbers<[1], [0], [0], [1], [0, 0, 1, 1], [], []>} : vector<128x32xbf16>, vector<32x48xbf16>, vector<128x48xf32> -> vector<128x48xf32>
    %4 = vector.extract_strided_slice %3 {offsets = [0, 32], sizes = [128, 16], strides = [1, 1]} : vector<128x48xf32> to vector<128x16xf32>
    %c0_4 = arith.constant 0 : index
    %c0_5 = arith.constant 0 : index
    %5 = vector.load %arg6[%c0_4, %c0_5] : memref<1x16xf32, #tpu.memory_space<vmem>>, vector<1x16xf32>
    %6 = vector.broadcast %5 : vector<1x16xf32> to vector<128x16xf32>
    %7 = arith.addf %4, %6 : vector<128x16xf32>
    %cst_6 = arith.constant 5.000000e-01 : f32
    %8 = vector.broadcast %cst_6 : f32 to vector<128x16xf32>
    %9 = arith.mulf %8, %7 : vector<128x16xf32>
    %cst_7 = arith.constant 4.471500e-02 : f32
    %10 = vector.broadcast %cst_7 : f32 to vector<128x16xf32>
    %11 = arith.mulf %10, %7 : vector<128x16xf32>
    %12 = arith.mulf %11, %7 : vector<128x16xf32>
    %13 = arith.mulf %12, %7 : vector<128x16xf32>
    %14 = arith.addf %7, %13 : vector<128x16xf32>
    %cst_8 = arith.constant 0.797884583 : f32
    %15 = vector.broadcast %cst_8 : f32 to vector<128x16xf32>
    %16 = arith.mulf %15, %14 : vector<128x16xf32>
    %17 = math.tanh %16 : vector<128x16xf32>
    %cst_9 = arith.constant 1.000000e+00 : f32
    %18 = vector.broadcast %cst_9 : f32 to vector<128x16xf32>
    %19 = arith.addf %18, %17 : vector<128x16xf32>
    %20 = arith.mulf %9, %19 : vector<128x16xf32>
    %21 = arith.truncf %20 : vector<128x16xf32> to vector<128x16xbf16>
    %c0_10 = arith.constant 0 : index
    %c0_11 = arith.constant 0 : index
    %c0_12 = arith.constant 0 : index
    %22 = vector.load %arg9[%c0_10, %c0_11, %c0_12] : memref<1x128x16xbf16, #tpu.memory_space<vmem>>, vector<1x128x16xbf16>
    %23 = vector.shape_cast %22 : vector<1x128x16xbf16> to vector<128x16xbf16>
    %24 = vector.shape_cast %21 : vector<128x16xbf16> to vector<1x128x16xbf16>
    tpu.vector_store %arg9[%c0_10, %c0_11, %c0_12], %24 {strides = array<i32>} : memref<1x128x16xbf16, #tpu.memory_space<vmem>>, vector<1x128x16xbf16>,
    %25 = vector.extract_strided_slice %3 {offsets = [0, 0], sizes = [128, 32], strides = [1, 1]} : vector<128x48xf32> to vector<128x32xf32>
    %c0_i32 = arith.constant 0 : i32
    %26 = arith.cmpi sgt, %arg1, %c0_i32 : i32
    %27 = arith.extui %26 : i1 to i32
    %28 = arith.sitofp %27 : i32 to f32
    %c1_i32 = arith.constant 1 : i32
    %29 = arith.cmpi slt, %arg1, %c1_i32 : i32
    %30 = arith.extui %29 : i1 to i32
    %31 = arith.sitofp %30 : i32 to f32
    %c0_13 = arith.constant 0 : index
    %c0_14 = arith.constant 0 : index
    %c0_15 = arith.constant 0 : index
    %32 = vector.load %arg3[%c0_13, %c0_14, %c0_15] : memref<1x16x32xbf16, #tpu.memory_space<vmem>>, vector<1x16x32xbf16>
    %33 = vector.shape_cast %32 : vector<1x16x32xbf16> to vector<16x32xbf16>
    %cst_16 = arith.constant dense<0.000000e+00> : vector<16x48xf32>
    %34 = tpu.matmul %33, %2, %cst_16 {dimension_numbers = #tpu.dot_dimension_numbers<[1], [0], [0], [1], [0, 0, 1, 1], [], []>} : vector<16x32xbf16>, vector<32x48xbf16>, vector<16x48xf32> -> vector<16x48xf32>
    %35 = vector.extract_strided_slice %34 {offsets = [0, 0], sizes = [16, 32], strides = [1, 1]} : vector<16x48xf32> to vector<16x32xf32>
    %36 = vector.broadcast %28 : f32 to vector<16x32xf32>
    %37 = arith.mulf %35, %36 : vector<16x32xf32>
    %c0_17 = arith.constant 0 : index
    %c0_18 = arith.constant 0 : index
    %c0_19 = arith.constant 0 : index
    %38 = vector.load %arg4[%c0_17, %c0_18, %c0_19] : memref<1x16x32xbf16, #tpu.memory_space<vmem>>, vector<1x16x32xbf16>
    %39 = vector.shape_cast %38 : vector<1x16x32xbf16> to vector<16x32xbf16>
    %cst_20 = arith.constant dense<0.000000e+00> : vector<16x48xf32>
    %40 = tpu.matmul %39, %2, %cst_20 {dimension_numbers = #tpu.dot_dimension_numbers<[1], [0], [0], [1], [0, 0, 1, 1], [], []>} : vector<16x32xbf16>, vector<32x48xbf16>, vector<16x48xf32> -> vector<16x48xf32>
    %41 = vector.extract_strided_slice %40 {offsets = [0, 0], sizes = [16, 32], strides = [1, 1]} : vector<16x48xf32> to vector<16x32xf32>
    %42 = vector.broadcast %31 : f32 to vector<16x32xf32>
    %43 = arith.mulf %41, %42 : vector<16x32xf32>
    %44 = vector.extract_strided_slice %25 {offsets = [0, 0], sizes = [112, 32], strides = [1, 1]} : vector<128x32xf32> to vector<112x32xf32>
    %45 = tpu.concatenate %37, %44 in 0 : vector<16x32xf32>, vector<112x32xf32> -> vector<128x32xf32>
    %46 = vector.extract_strided_slice %25 {offsets = [16, 0], sizes = [112, 32], strides = [1, 1]} : vector<128x32xf32> to vector<112x32xf32>
    %47 = tpu.concatenate %46, %43 in 0 : vector<112x32xf32>, vector<16x32xf32> -> vector<128x32xf32>
    %c0_21 = arith.constant 0 : index
    %c0_22 = arith.constant 0 : index
    %48 = vector.load %arg7[%c0_21, %c0_22] : memref<9x32xf32, #tpu.memory_space<vmem>>, vector<9x32xf32>
    %49 = vector.extract_strided_slice %48 {offsets = [0, 0], sizes = [1, 32], strides = [1, 1]} : vector<9x32xf32> to vector<1x32xf32>
    %50 = vector.broadcast %49 : vector<1x32xf32> to vector<128x32xf32>
    %51 = arith.mulf %45, %50 : vector<128x32xf32>
    %52 = vector.extract_strided_slice %48 {offsets = [3, 0], sizes = [1, 32], strides = [1, 1]} : vector<9x32xf32> to vector<1x32xf32>
    %53 = vector.broadcast %52 : vector<1x32xf32> to vector<128x32xf32>
    %54 = arith.mulf %25, %53 : vector<128x32xf32>
    %55 = arith.addf %51, %54 : vector<128x32xf32>
    %56 = vector.extract_strided_slice %48 {offsets = [6, 0], sizes = [1, 32], strides = [1, 1]} : vector<9x32xf32> to vector<1x32xf32>
    %57 = vector.broadcast %56 : vector<1x32xf32> to vector<128x32xf32>
    %58 = arith.mulf %47, %57 : vector<128x32xf32>
    %59 = arith.addf %55, %58 : vector<128x32xf32>
    %60 = vector.extract_strided_slice %48 {offsets = [1, 0], sizes = [1, 32], strides = [1, 1]} : vector<9x32xf32> to vector<1x32xf32>
    %61 = vector.broadcast %60 : vector<1x32xf32> to vector<128x32xf32>
    %62 = arith.mulf %45, %61 : vector<128x32xf32>
    %63 = vector.extract_strided_slice %48 {offsets = [4, 0], sizes = [1, 32], strides = [1, 1]} : vector<9x32xf32> to vector<1x32xf32>
    %64 = vector.broadcast %63 : vector<1x32xf32> to vector<128x32xf32>
    %65 = arith.mulf %25, %64 : vector<128x32xf32>
    %66 = arith.addf %62, %65 : vector<128x32xf32>
    %67 = vector.extract_strided_slice %48 {offsets = [7, 0], sizes = [1, 32], strides = [1, 1]} : vector<9x32xf32> to vector<1x32xf32>
    %68 = vector.broadcast %67 : vector<1x32xf32> to vector<128x32xf32>
    %69 = arith.mulf %47, %68 : vector<128x32xf32>
    %70 = arith.addf %66, %69 : vector<128x32xf32>
    %71 = vector.extract_strided_slice %48 {offsets = [2, 0], sizes = [1, 32], strides = [1, 1]} : vector<9x32xf32> to vector<1x32xf32>
    %72 = vector.broadcast %71 : vector<1x32xf32> to vector<128x32xf32>
    %73 = arith.mulf %45, %72 : vector<128x32xf32>
    %74 = vector.extract_strided_slice %48 {offsets = [5, 0], sizes = [1, 32], strides = [1, 1]} : vector<9x32xf32> to vector<1x32xf32>
    %75 = vector.broadcast %74 : vector<1x32xf32> to vector<128x32xf32>
    %76 = arith.mulf %25, %75 : vector<128x32xf32>
    %77 = arith.addf %73, %76 : vector<128x32xf32>
    %78 = vector.extract_strided_slice %48 {offsets = [8, 0], sizes = [1, 32], strides = [1, 1]} : vector<9x32xf32> to vector<1x32xf32>
    %79 = vector.broadcast %78 : vector<1x32xf32> to vector<128x32xf32>
    %80 = arith.mulf %47, %79 : vector<128x32xf32>
    %81 = arith.addf %77, %80 : vector<128x32xf32>
    %c8 = arith.constant 8 : index
    %c0_23 = arith.constant 0 : index
    %82 = vector.load %arg11[%c8, %c0_23] : memref<144x32xf32, #tpu.memory_space<vmem>>, vector<128x32xf32>
    tpu.vector_store %arg11[%c8, %c0_23], %59 {strides = array<i32>} : memref<144x32xf32, #tpu.memory_space<vmem>>, vector<128x32xf32>,
    %c8_24 = arith.constant 8 : index
    %c0_25 = arith.constant 0 : index
    %83 = vector.load %arg12[%c8_24, %c0_25] : memref<144x32xf32, #tpu.memory_space<vmem>>, vector<128x32xf32>
    tpu.vector_store %arg12[%c8_24, %c0_25], %81 {strides = array<i32>} : memref<144x32xf32, #tpu.memory_space<vmem>>, vector<128x32xf32>,
    %c7 = arith.constant 7 : index
    %c0_26 = arith.constant 0 : index
    %84 = vector.load %arg11[%c7, %c0_26] : memref<144x32xf32, #tpu.memory_space<vmem>>, vector<128x32xf32>
    %c9 = arith.constant 9 : index
    %c0_27 = arith.constant 0 : index
    %85 = vector.load %arg12[%c9, %c0_27] : memref<144x32xf32, #tpu.memory_space<vmem>>, vector<128x32xf32>
    %86 = tpu.iota {dimensions = array<i32: 0>} : vector<128x32xi32>
    %c15_i32 = arith.constant 15 : i32
    %87 = vector.broadcast %c15_i32 : i32 to vector<128x32xi32>
    %88 = arith.andi %86, %87 : vector<128x32xi32>
    %c0_i32_28 = arith.constant 0 : i32
    %89 = vector.broadcast %c0_i32_28 : i32 to vector<128x32xi32>
    %90 = arith.cmpi ne, %88, %89 : vector<128x32xi32>
    %cst_29 = arith.constant 0.000000e+00 : f32
    %91 = vector.broadcast %cst_29 : f32 to vector<128x32xf32>
    %92 = arith.select %90, %84, %91 : vector<128x32xi1>, vector<128x32xf32>
    %93 = arith.addf %70, %92 : vector<128x32xf32>
    %c15_i32_30 = arith.constant 15 : i32
    %94 = vector.broadcast %c15_i32_30 : i32 to vector<128x32xi32>
    %95 = arith.cmpi ne, %88, %94 : vector<128x32xi32>
    %cst_31 = arith.constant 0.000000e+00 : f32
    %96 = vector.broadcast %cst_31 : f32 to vector<128x32xf32>
    %97 = arith.select %95, %85, %96 : vector<128x32xi1>, vector<128x32xf32>
    %98 = arith.addf %93, %97 : vector<128x32xf32>
    %c0_32 = arith.constant 0 : index
    %c0_33 = arith.constant 0 : index
    %99 = vector.load %arg8[%c0_32, %c0_33] : memref<1x32xf32, #tpu.memory_space<vmem>>, vector<1x32xf32>
    %100 = vector.broadcast %99 : vector<1x32xf32> to vector<128x32xf32>
    %101 = arith.addf %98, %100 : vector<128x32xf32>
    %102 = arith.extf %1 : vector<128x32xbf16> to vector<128x32xf32>
    %103 = arith.addf %101, %102 : vector<128x32xf32>
    %cst_34 = arith.constant 5.000000e-01 : f32
    %104 = vector.broadcast %cst_34 : f32 to vector<128x32xf32>
    %105 = arith.mulf %104, %103 : vector<128x32xf32>
    %cst_35 = arith.constant 4.471500e-02 : f32
    %106 = vector.broadcast %cst_35 : f32 to vector<128x32xf32>
    %107 = arith.mulf %106, %103 : vector<128x32xf32>
    %108 = arith.mulf %107, %103 : vector<128x32xf32>
    %109 = arith.mulf %108, %103 : vector<128x32xf32>
    %110 = arith.addf %103, %109 : vector<128x32xf32>
    %cst_36 = arith.constant 0.797884583 : f32
    %111 = vector.broadcast %cst_36 : f32 to vector<128x32xf32>
    %112 = arith.mulf %111, %110 : vector<128x32xf32>
    %113 = math.tanh %112 : vector<128x32xf32>
    %cst_37 = arith.constant 1.000000e+00 : f32
    %114 = vector.broadcast %cst_37 : f32 to vector<128x32xf32>
    %115 = arith.addf %114, %113 : vector<128x32xf32>
    %116 = arith.mulf %105, %115 : vector<128x32xf32>
    %117 = arith.truncf %116 : vector<128x32xf32> to vector<128x32xbf16>
    %c0_38 = arith.constant 0 : index
    %c0_39 = arith.constant 0 : index
    %c0_40 = arith.constant 0 : index
    %118 = vector.load %arg10[%c0_38, %c0_39, %c0_40] : memref<1x128x32xbf16, #tpu.memory_space<vmem>>, vector<1x128x32xbf16>
    %119 = vector.shape_cast %118 : vector<1x128x32xbf16> to vector<128x32xbf16>
    %120 = vector.shape_cast %117 : vector<128x32xbf16> to vector<1x128x32xbf16>
    tpu.vector_store %arg10[%c0_38, %c0_39, %c0_40], %120 {strides = array<i32>} : memref<1x128x32xbf16, #tpu.memory_space<vmem>>, vector<1x128x32xbf16>,
    return
  }
  func.func @transform_0(%arg0: i32, %arg1: i32) -> (i32, i32, i32) {
    %c0_i32 = arith.constant 0 : i32
    %c0_i32_0 = arith.constant 0 : i32
    return %arg0, %arg1, %c0_i32 : i32, i32, i32
  }
  func.func @transform_1(%arg0: i32, %arg1: i32) -> (i32, i32, i32) {
    %c8_i32 = arith.constant 8 : i32
    %0 = arith.muli %arg1, %c8_i32 : i32
    %c1_i32 = arith.constant 1 : i32
    %1 = arith.subi %0, %c1_i32 : i32
    %c0_i32 = arith.constant 0 : i32
    %2 = arith.maxsi %1, %c0_i32 : i32
    %c0_i32_0 = arith.constant 0 : i32
    %c0_i32_1 = arith.constant 0 : i32
    return %arg0, %2, %c0_i32_0 : i32, i32, i32
  }
  func.func @transform_2(%arg0: i32, %arg1: i32) -> (i32, i32, i32) {
    %c8_i32 = arith.constant 8 : i32
    %0 = arith.muli %arg1, %c8_i32 : i32
    %c8_i32_0 = arith.constant 8 : i32
    %1 = arith.addi %0, %c8_i32_0 : i32
    %c15_i32 = arith.constant 15 : i32
    %2 = arith.minsi %1, %c15_i32 : i32
    %c0_i32 = arith.constant 0 : i32
    %c0_i32_1 = arith.constant 0 : i32
    return %arg0, %2, %c0_i32 : i32, i32, i32
  }
  func.func @transform_3(%arg0: i32, %arg1: i32) -> (i32, i32) {
    %c0_i32 = arith.constant 0 : i32
    %c0_i32_0 = arith.constant 0 : i32
    %c0_i32_1 = arith.constant 0 : i32
    return %c0_i32, %c0_i32_0 : i32, i32
  }
  func.func @transform_4(%arg0: i32, %arg1: i32) -> (i32, i32) {
    %c0_i32 = arith.constant 0 : i32
    %c0_i32_0 = arith.constant 0 : i32
    %c0_i32_1 = arith.constant 0 : i32
    return %c0_i32, %c0_i32_0 : i32, i32
  }
  func.func @transform_5(%arg0: i32, %arg1: i32) -> (i32, i32) {
    %c0_i32 = arith.constant 0 : i32
    %c0_i32_0 = arith.constant 0 : i32
    %c0_i32_1 = arith.constant 0 : i32
    return %c0_i32, %c0_i32_0 : i32, i32
  }
  func.func @transform_6(%arg0: i32, %arg1: i32) -> (i32, i32) {
    %c0_i32 = arith.constant 0 : i32
    %c0_i32_0 = arith.constant 0 : i32
    %c0_i32_1 = arith.constant 0 : i32
    return %c0_i32, %c0_i32_0 : i32, i32
  }
  func.func @transform_7(%arg0: i32, %arg1: i32) -> (i32, i32, i32) {
    %c0_i32 = arith.constant 0 : i32
    %c0_i32_0 = arith.constant 0 : i32
    return %arg0, %arg1, %c0_i32 : i32, i32, i32
  }
  func.func @transform_8(%arg0: i32, %arg1: i32) -> (i32, i32, i32) {
    %c0_i32 = arith.constant 0 : i32
    %c0_i32_0 = arith.constant 0 : i32
    return %arg0, %arg1, %c0_i32 : i32, i32, i32
  }
}

</mosaic_0001>

<llo_original>
// kernel: _fused_stage.1
$region0: #{_fused_stage.1}
  #allocation0 [shape = 'u32[]', space=smem, size = 0x4, offset = 0x4, fixed_abs, tag = 'smem constant byte address 0x4 - core index']
  #allocation1 [shape = 'u32[144,128]{1,0:T(1,128)}', space=vmem, size = 0x12000, scoped, tag = 'internal scratch']
  #allocation2 [shape = 'f32[144,32]{1,0:T(8,128)}', space=vmem, size = 0x12000, scoped, tag = 'scratch operand']
  #allocation3 [shape = 'f32[144,32]{1,0:T(8,128)}', space=vmem, size = 0x12000, scoped, tag = 'scratch operand']
  %s0 = inlined_call_operand.vmem [shape: bf16[1,256,32], index: 0, kind: input, shape index: {}, may-alias: {0,1,2}]
  %s1 = inlined_call_operand.vmem [shape: bf16[1,256,32], index: 1, kind: input, shape index: {}, may-alias: {0,1,2}]
  %s2 = inlined_call_operand.vmem [shape: bf16[1,256,32], index: 2, kind: input, shape index: {}, may-alias: {0,1,2}]
  %s3 = inlined_call_operand.vmem [shape: bf16[32,48], index: 3, kind: input, shape index: {}]
  %s4 = inlined_call_operand.vmem [shape: f32[1,16], index: 4, kind: input, shape index: {}]
  %s5 = inlined_call_operand.vmem [shape: f32[9,32], index: 5, kind: input, shape index: {}]
  %s6 = inlined_call_operand.vmem [shape: f32[1,32], index: 6, kind: input, shape index: {}]
  %s7 = inlined_call_operand.vmem [shape: bf16[1,256,16], index: 7, kind: output, shape index: {0}]
  %s8 = inlined_call_operand.vmem [shape: bf16[1,256,32], index: 8, kind: output, shape index: {1}]
  %9 = xla_tuple %s7, %s8
  %s10 = sld [smem:[#allocation0]]
  $region69: #{_fused_stage.1} parent=0
    _
  %s12 = ssub.s32 1, %s10
  %s13 = scalar_select 0, %s12, %s10
  loop: start=0, step=1, limit=4
  $region2: #{_fused_stage.1} parent=0 // loop_pre_header
    _
  $region3: #{_fused_stage.1} parent=0 // loop_header
    %s15 = sphi 0, %s19
    %p16 = scmp.ge.s32.totalorder %s15, 4
    %s22 = sphi 0, %s34
    %s23 = sphi 0, %s30
    %s24 = sphi 0, %s22
    %s25 = sphi 0, %s23
    %s26 = sphi 0, %s24
    %s27 = sphi 0, %s25
    %s39 = sphi 0, %s41
    %s42 = sphi 0, %s39
    %s43 = sphi 0, %s42
    %s59 = sphi 0, %s43
    %s75 = sphi 0, %s77
    %s78 = sphi 0, %s75
    %s79 = sphi 0, %s78
    %s95 = sphi 0, %s79
    %s111 = sphi 0, %s113
    %s114 = sphi 0, %s111
    %s115 = sphi 0, %s114
    %s131 = sphi 0, %s115
    %s135 = sphi 0, %s135
    %s137 = sphi 0, %s135
    %s138 = sphi 0, %s137
    %s152 = sphi 0, %s138
    %s156 = sphi 0, %s156
    %s158 = sphi 0, %s156
    %s159 = sphi 0, %s158
    %s173 = sphi 0, %s159
    %s177 = sphi 0, %s177
    %s179 = sphi 0, %s177
    %s180 = sphi 0, %s179
    %s194 = sphi 0, %s180
    %s198 = sphi 0, %s198
    %s200 = sphi 0, %s198
    %s201 = sphi 0, %s200
    %s215 = sphi 0, %s201
    %s223 = sphi 0, %s225
    %s226 = sphi 0, %s223
    %s227 = sphi 0, %s226
    %s243 = sphi 0, %s227
    %s251 = sphi 0, %s253
    %s254 = sphi 0, %s251
    %s255 = sphi 0, %s254
    %s271 = sphi 0, %s255
  $region4: #{_fused_stage.1} parent=0 // loop_header_branch
    %18 = sbr.rel (%p16) target = $region8
  $region5: #{_fused_stage.1} parent=0 // loop_body
    %s20 = ssub.s32 %s15, 1
    %s21 = ssub.s32 %s15, 2
    %s28 = sadd.s32 1, %s23
    %p29 = scmp.ge.s32.totalorder %s28, 2
    %s30 = scalar_select %p29, 0, %s28
    %s31 = sadd.s32 1, %s22
    %s32 = scalar_select %p29, %s31, %s22
    %p33 = scmp.ge.s32.totalorder %s32, 1
    %s34 = scalar_select %p33, 0, %s32
    %s35 = ssub.s32 %s22, %s34
    %s36 = ssub.s32 %s23, %s30
    %s37 = sor.u32 %s35, %s36
    %p38 = scmp.eq.s32.totalorder %s37, 0
    %s40 = sadd.s32 %s39, 1
    %s41 = scalar_select %p38, %s39, %s40
    %p44 = pneg %p38
    %p45 = scmp.eq.s32.totalorder %s15, 1
    %p46 = por %p44, %p45
    %p47 = scmp.ne.s32.totalorder %s39, %s42
    %p48 = scmp.eq.s32.totalorder %s15, 0
    %p49 = por %p47, %p48
    %p50 = scmp.ne.s32.totalorder %s39, %s42
    %p51 = scmp.eq.s32.totalorder %s20, 1
    %p52 = por %p50, %p51
    %p53 = scmp.ne.s32.totalorder %s42, %s43
    %p54 = scmp.eq.s32.totalorder %s20, 0
    %p55 = por %p53, %p54
    %p56 = scmp.ne.s32.totalorder %s42, %s43
    %p57 = scmp.eq.s32.totalorder %s21, 1
    %p58 = por %p56, %p57
    %p60 = scmp.ne.s32.totalorder %s43, %s59
    %p61 = scmp.eq.s32.totalorder %s21, 0
    %p62 = por %p60, %p61
    %s63 = smul.u32 %s23, 8
    %s64 = ssub.s32 %s63, 1
    %p65 = scmp.gt.s32.totalorder %s64, 0
    %s66 = scalar_select %p65, %s64, 0
    %s67 = smul.u32 %s30, 8
    %s68 = ssub.s32 %s67, 1
    %p69 = scmp.gt.s32.totalorder %s68, 0
    %s70 = scalar_select %p69, %s68, 0
    %s71 = ssub.s32 %s22, %s34
    %s72 = ssub.s32 %s66, %s70
    %s73 = sor.u32 %s71, %s72
    %p74 = scmp.eq.s32.totalorder %s73, 0
    %s76 = sadd.s32 %s75, 1
    %s77 = scalar_select %p74, %s75, %s76
    %p80 = pneg %p74
    %p81 = scmp.eq.s32.totalorder %s15, 1
    %p82 = por %p80, %p81
    %p83 = scmp.ne.s32.totalorder %s75, %s78
    %p84 = scmp.eq.s32.totalorder %s15, 0
    %p85 = por %p83, %p84
    %p86 = scmp.ne.s32.totalorder %s75, %s78
    %p87 = scmp.eq.s32.totalorder %s20, 1
    %p88 = por %p86, %p87
    %p89 = scmp.ne.s32.totalorder %s78, %s79
    %p90 = scmp.eq.s32.totalorder %s20, 0
    %p91 = por %p89, %p90
    %p92 = scmp.ne.s32.totalorder %s78, %s79
    %p93 = scmp.eq.s32.totalorder %s21, 1
    %p94 = por %p92, %p93
    %p96 = scmp.ne.s32.totalorder %s79, %s95
    %p97 = scmp.eq.s32.totalorder %s21, 0
    %p98 = por %p96, %p97
    %s99 = smul.u32 %s23, 8
    %s100 = sadd.s32 %s99, 8
    %p101 = scmp.lt.s32.totalorder %s100, 15
    %s102 = scalar_select %p101, %s100, 15
    %s103 = smul.u32 %s30, 8
    %s104 = sadd.s32 %s103, 8
    %p105 = scmp.lt.s32.totalorder %s104, 15
    %s106 = scalar_select %p105, %s104, 15
    %s107 = ssub.s32 %s22, %s34
    %s108 = ssub.s32 %s102, %s106
    %s109 = sor.u32 %s107, %s108
    %p110 = scmp.eq.s32.totalorder %s109, 0
    %s112 = sadd.s32 %s111, 1
    %s113 = scalar_select %p110, %s111, %s112
    %p116 = pneg %p110
    %p117 = scmp.eq.s32.totalorder %s15, 1
    %p118 = por %p116, %p117
    %p119 = scmp.ne.s32.totalorder %s111, %s114
    %p120 = scmp.eq.s32.totalorder %s15, 0
    %p121 = por %p119, %p120
    %p122 = scmp.ne.s32.totalorder %s111, %s114
    %p123 = scmp.eq.s32.totalorder %s20, 1
    %p124 = por %p122, %p123
    %p125 = scmp.ne.s32.totalorder %s114, %s115
    %p126 = scmp.eq.s32.totalorder %s20, 0
    %p127 = por %p125, %p126
    %p128 = scmp.ne.s32.totalorder %s114, %s115
    %p129 = scmp.eq.s32.totalorder %s21, 1
    %p130 = por %p128, %p129
    %p132 = scmp.ne.s32.totalorder %s115, %s131
    %p133 = scmp.eq.s32.totalorder %s21, 0
    %p134 = por %p132, %p133
    %s136 = sadd.s32 %s135, 1
    %p139 = scmp.eq.s32.totalorder %s15, 1
    %p140 = scmp.ne.s32.totalorder %s135, %s137
    %p141 = scmp.eq.s32.totalorder %s15, 0
    %p142 = por %p140, %p141
    %p143 = scmp.ne.s32.totalorder %s135, %s137
    %p144 = scmp.eq.s32.totalorder %s20, 1
    %p145 = por %p143, %p144
    %p146 = scmp.ne.s32.totalorder %s137, %s138
    %p147 = scmp.eq.s32.totalorder %s20, 0
    %p148 = por %p146, %p147
    %p149 = scmp.ne.s32.totalorder %s137, %s138
    %p150 = scmp.eq.s32.totalorder %s21, 1
    %p151 = por %p149, %p150
    %p153 = scmp.ne.s32.totalorder %s138, %s152
    %p154 = scmp.eq.s32.totalorder %s21, 0
    %p155 = por %p153, %p154
    %s157 = sadd.s32 %s156, 1
    %p160 = scmp.eq.s32.totalorder %s15, 1
    %p161 = scmp.ne.s32.totalorder %s156, %s158
    %p162 = scmp.eq.s32.totalorder %s15, 0
    %p163 = por %p161, %p162
    %p164 = scmp.ne.s32.totalorder %s156, %s158
    %p165 = scmp.eq.s32.totalorder %s20, 1
    %p166 = por %p164, %p165
    %p167 = scmp.ne.s32.totalorder %s158, %s159
    %p168 = scmp.eq.s32.totalorder %s20, 0
    %p169 = por %p167, %p168
    %p170 = scmp.ne.s32.totalorder %s158, %s159
    %p171 = scmp.eq.s32.totalorder %s21, 1
    %p172 = por %p170, %p171
    %p174 = scmp.ne.s32.totalorder %s159, %s173
    %p175 = scmp.eq.s32.totalorder %s21, 0
    %p176 = por %p174, %p175
    %s178 = sadd.s32 %s177, 1
    %p181 = scmp.eq.s32.totalorder %s15, 1
    %p182 = scmp.ne.s32.totalorder %s177, %s179
    %p183 = scmp.eq.s32.totalorder %s15, 0
    %p184 = por %p182, %p183
    %p185 = scmp.ne.s32.totalorder %s177, %s179
    %p186 = scmp.eq.s32.totalorder %s20, 1
    %p187 = por %p185, %p186
    %p188 = scmp.ne.s32.totalorder %s179, %s180
    %p189 = scmp.eq.s32.totalorder %s20, 0
    %p190 = por %p188, %p189
    %p191 = scmp.ne.s32.totalorder %s179, %s180
    %p192 = scmp.eq.s32.totalorder %s21, 1
    %p193 = por %p191, %p192
    %p195 = scmp.ne.s32.totalorder %s180, %s194
    %p196 = scmp.eq.s32.totalorder %s21, 0
    %p197 = por %p195, %p196
    %s199 = sadd.s32 %s198, 1
    %p202 = scmp.eq.s32.totalorder %s15, 1
    %p203 = scmp.ne.s32.totalorder %s198, %s200
    %p204 = scmp.eq.s32.totalorder %s15, 0
    %p205 = por %p203, %p204
    %p206 = scmp.ne.s32.totalorder %s198, %s200
    %p207 = scmp.eq.s32.totalorder %s20, 1
    %p208 = por %p206, %p207
    %p209 = scmp.ne.s32.totalorder %s200, %s201
    %p210 = scmp.eq.s32.totalorder %s20, 0
    %p211 = por %p209, %p210
    %p212 = scmp.ne.s32.totalorder %s200, %s201
    %p213 = scmp.eq.s32.totalorder %s21, 1
    %p214 = por %p212, %p213
    %p216 = scmp.ne.s32.totalorder %s201, %s215
    %p217 = scmp.eq.s32.totalorder %s21, 0
    %p218 = por %p216, %p217
    %s219 = ssub.s32 %s22, %s34
    %s220 = ssub.s32 %s23, %s30
    %s221 = sor.u32 %s219, %s220
    %p222 = scmp.eq.s32.totalorder %s221, 0
    %s224 = sadd.s32 %s223, 1
    %s225 = scalar_select %p222, %s223, %s224
    %p228 = pneg %p222
    %p229 = scmp.eq.s32.totalorder %s15, 1
    %p230 = por %p228, %p229
    %p231 = scmp.ne.s32.totalorder %s223, %s226
    %p232 = scmp.eq.s32.totalorder %s15, 0
    %p233 = por %p231, %p232
    %p234 = scmp.ne.s32.totalorder %s223, %s226
    %p235 = scmp.eq.s32.totalorder %s20, 1
    %p236 = por %p234, %p235
    %p237 = scmp.ne.s32.totalorder %s226, %s227
    %p238 = scmp.eq.s32.totalorder %s20, 0
    %p239 = por %p237, %p238
    %p240 = scmp.ne.s32.totalorder %s226, %s227
    %p241 = scmp.eq.s32.totalorder %s21, 1
    %p242 = por %p240, %p241
    %p244 = scmp.ne.s32.totalorder %s227, %s243
    %p245 = scmp.eq.s32.totalorder %s21, 0
    %p246 = por %p244, %p245
    %s247 = ssub.s32 %s22, %s34
    %s248 = ssub.s32 %s23, %s30
    %s249 = sor.u32 %s247, %s248
    %p250 = scmp.eq.s32.totalorder %s249, 0
    %s252 = sadd.s32 %s251, 1
    %s253 = scalar_select %p250, %s251, %s252
    %p256 = pneg %p250
    %p257 = scmp.eq.s32.totalorder %s15, 1
    %p258 = por %p256, %p257
    %p259 = scmp.ne.s32.totalorder %s251, %s254
    %p260 = scmp.eq.s32.totalorder %s15, 0
    %p261 = por %p259, %p260
    %p262 = scmp.ne.s32.totalorder %s251, %s254
    %p263 = scmp.eq.s32.totalorder %s20, 1
    %p264 = por %p262, %p263
    %p265 = scmp.ne.s32.totalorder %s254, %s255
    %p266 = scmp.eq.s32.totalorder %s20, 0
    %p267 = por %p265, %p266
    %p268 = scmp.ne.s32.totalorder %s254, %s255
    %p269 = scmp.eq.s32.totalorder %s21, 1
    %p270 = por %p268, %p269
    %p272 = scmp.ne.s32.totalorder %s255, %s271
    %p273 = scmp.eq.s32.totalorder %s21, 0
    %p274 = por %p272, %p273
    %p275 = scmp.le.s32.totalorder 1, %s15
    %p276 = scmp.lt.s32.totalorder %s15, 3
    %p277 = pnand %p275, %p276
    %p278 = pneg %p277
    // Predicated region
    $region9: #{_fused_stage.1} parent=5 // pred_check
      _
    $region10: #{_fused_stage.1} parent=5 // pred_check_branch
      %280 = sbr.rel (%p277) target = $region12
    $region11: #{_fused_stage.1} parent=5 // pred_region
      %s281 = ssub.s32 %s15, 1
      // Predicated region
      $region13: #{_fused_stage.1} parent=11 // pred_check
        %p282 = pneg %p148
      $region14: #{_fused_stage.1} parent=11 // pred_check_branch
        %284 = sbr.rel (%p282) target = $region16
      $region15: #{_fused_stage.1} parent=11 // pred_region
        _
      $region16: #{_fused_stage.1} parent=11 // pred_fallthru
        _
      // Predicated region
      $region17: #{_fused_stage.1} parent=11 // pred_check
        %p285 = pneg %p169
      $region18: #{_fused_stage.1} parent=11 // pred_check_branch
        %287 = sbr.rel (%p285) target = $region20
      $region19: #{_fused_stage.1} parent=11 // pred_region
        _
      $region20: #{_fused_stage.1} parent=11 // pred_fallthru
        _
      // Predicated region
      $region21: #{_fused_stage.1} parent=11 // pred_check
        %p288 = pneg %p190
      $region22: #{_fused_stage.1} parent=11 // pred_check_branch
        %290 = sbr.rel (%p288) target = $region24
      $region23: #{_fused_stage.1} parent=11 // pred_region
        _
      $region24: #{_fused_stage.1} parent=11 // pred_fallthru
        _
      // Predicated region
      $region25: #{_fused_stage.1} parent=11 // pred_check
        %p291 = pneg %p211
      $region26: #{_fused_stage.1} parent=11 // pred_check_branch
        %293 = sbr.rel (%p291) target = $region28
      $region27: #{_fused_stage.1} parent=11 // pred_region
        _
      $region28: #{_fused_stage.1} parent=11 // pred_fallthru
        _
    $region12: #{_fused_stage.1} parent=5 // pred_fallthru
      _
    %p294 = scmp.lt.s32.totalorder %s15, 2
    // Predicated region
    $region29: #{_fused_stage.1} parent=5 // pred_check
      %p295 = pneg %p294
    $region30: #{_fused_stage.1} parent=5 // pred_check_branch
      %297 = sbr.rel (%p295) target = $region32
    $region31: #{_fused_stage.1} parent=5 // pred_region
      // Predicated region
      $region33: #{_fused_stage.1} parent=31 // pred_check
        %p298 = pneg %p49
      $region34: #{_fused_stage.1} parent=31 // pred_check_branch
        %300 = sbr.rel (%p298) target = $region36
      $region35: #{_fused_stage.1} parent=31 // pred_region
        %s301 = smul.u32 16, %s23
        %p302 = scmp.lt.s32.totalorder %s22, 0
        %s303 = scalar_select %p302, %s22, 0
        %p304 = scmp.lt.s32.totalorder %s301, 31
        %s305 = scalar_select %p304, %s301, 31
        %s306 = smul.addr %s303, 32
        %s307 = sadd.s32 %s305, %s306
        %s308 = smul.addr %s307, 4
        %s309 = scalar_lea.vmem %s0, %s308
        %s310 = smul.u32 16, %s23
      $region36: #{_fused_stage.1} parent=31 // pred_fallthru
        _
      // Predicated region
      $region37: #{_fused_stage.1} parent=31 // pred_check
        %p311 = pneg %p85
      $region38: #{_fused_stage.1} parent=31 // pred_check_branch
        %313 = sbr.rel (%p311) target = $region40
      $region39: #{_fused_stage.1} parent=31 // pred_region
        %s314 = smul.u32 %s23, 8
        %s315 = ssub.s32 %s314, 1
        %p316 = scmp.gt.s32.totalorder %s315, 0
        %s317 = scalar_select %p316, %s315, 0
        %s318 = smul.u32 2, %s317
        %p319 = scmp.lt.s32.totalorder %s22, 0
        %s320 = scalar_select %p319, %s22, 0
        %p321 = scmp.lt.s32.totalorder %s318, 31
        %s322 = scalar_select %p321, %s318, 31
        %s323 = smul.addr %s320, 32
        %s324 = sadd.s32 %s322, %s323
        %s325 = smul.addr %s324, 4
        %s326 = scalar_lea.vmem %s1, %s325
        %s327 = smul.u32 %s23, 8
        %s328 = ssub.s32 %s327, 1
        %p329 = scmp.gt.s32.totalorder %s328, 0
        %s330 = scalar_select %p329, %s328, 0
        %s331 = smul.u32 2, %s330
      $region40: #{_fused_stage.1} parent=31 // pred_fallthru
        _
      // Predicated region
      $region41: #{_fused_stage.1} parent=31 // pred_check
        %p332 = pneg %p121
      $region42: #{_fused_stage.1} parent=31 // pred_check_branch
        %334 = sbr.rel (%p332) target = $region44
      $region43: #{_fused_stage.1} parent=31 // pred_region
        %s335 = smul.u32 %s23, 8
        %s336 = sadd.s32 %s335, 8
        %p337 = scmp.lt.s32.totalorder %s336, 15
        %s338 = scalar_select %p337, %s336, 15
        %s339 = smul.u32 2, %s338
        %p340 = scmp.lt.s32.totalorder %s22, 0
        %s341 = scalar_select %p340, %s22, 0
        %p342 = scmp.lt.s32.totalorder %s339, 31
        %s343 = scalar_select %p342, %s339, 31
        %s344 = smul.addr %s341, 32
        %s345 = sadd.s32 %s343, %s344
        %s346 = smul.addr %s345, 4
        %s347 = scalar_lea.vmem %s2, %s346
        %s348 = smul.u32 %s23, 8
        %s349 = sadd.s32 %s348, 8
        %p350 = scmp.lt.s32.totalorder %s349, 15
        %s351 = scalar_select %p350, %s349, 15
        %s352 = smul.u32 2, %s351
      $region44: #{_fused_stage.1} parent=31 // pred_fallthru
        _
    $region32: #{_fused_stage.1} parent=5 // pred_fallthru
      _
    %p353 = scmp.le.s32.totalorder 1, %s15
    %p354 = scmp.lt.s32.totalorder %s15, 3
    %p355 = pnand %p353, %p354
    %p356 = pneg %p355
    // Predicated region
    $region45: #{_fused_stage.1} parent=5 // pred_check
      _
    $region46: #{_fused_stage.1} parent=5 // pred_check_branch
      %358 = sbr.rel (%p355) target = $region48
    $region47: #{_fused_stage.1} parent=5 // pred_region
      %s359 = ssub.s32 %s15, 1
      %s360 = smul.u32 16, %s25
      %p361 = scmp.lt.s32.totalorder %s24, 0
      %s362 = scalar_select %p361, %s24, 0
      %p363 = scmp.lt.s32.totalorder %s360, 31
      %s364 = scalar_select %p363, %s360, 31
      %s365 = smul.addr %s362, 32
      %s366 = sadd.s32 %s364, %s365
      %s367 = smul.addr %s366, 4
      %s368 = scalar_lea.vmem %s0, %s367
      %p369 = pneg %p55
      %p370 = pneg %p52
      %s371 = smul.u32 %s25, 8
      %s372 = ssub.s32 %s371, 1
      %p373 = scmp.gt.s32.totalorder %s372, 0
      %s374 = scalar_select %p373, %s372, 0
      %s375 = smul.u32 2, %s374
      %p376 = scmp.lt.s32.totalorder %s24, 0
      %s377 = scalar_select %p376, %s24, 0
      %p378 = scmp.lt.s32.totalorder %s375, 31
      %s379 = scalar_select %p378, %s375, 31
      %s380 = smul.addr %s377, 32
      %s381 = sadd.s32 %s379, %s380
      %s382 = smul.addr %s381, 4
      %s383 = scalar_lea.vmem %s1, %s382
      %p384 = pneg %p91
      %p385 = pneg %p88
      %s386 = smul.u32 %s25, 8
      %s387 = sadd.s32 %s386, 8
      %p388 = scmp.lt.s32.totalorder %s387, 15
      %s389 = scalar_select %p388, %s387, 15
      %s390 = smul.u32 2, %s389
      %p391 = scmp.lt.s32.totalorder %s24, 0
      %s392 = scalar_select %p391, %s24, 0
      %p393 = scmp.lt.s32.totalorder %s390, 31
      %s394 = scalar_select %p393, %s390, 31
      %s395 = smul.addr %s392, 32
      %s396 = sadd.s32 %s394, %s395
      %s397 = smul.addr %s396, 4
      %s398 = scalar_lea.vmem %s2, %s397
      %p399 = pneg %p127
      %p400 = pneg %p124
      %p401 = pneg %p148
      %p402 = pneg %p145
      %p403 = pneg %p169
      %p404 = pneg %p166
      %p405 = pneg %p190
      %p406 = pneg %p187
      %p407 = pneg %p211
      %p408 = pneg %p208
      %p409 = pneg %p239
      %p410 = pneg %p236
      %s411 = smul.u32 16, %s25
      %p412 = scmp.lt.s32.totalorder %s24, 0
      %s413 = scalar_select %p412, %s24, 0
      %p414 = scmp.lt.s32.totalorder %s411, 31
      %s415 = scalar_select %p414, %s411, 31
      %s416 = smul.addr %s413, 32
      %s417 = sadd.s32 %s415, %s416
      %s418 = smul.addr %s417, 4
      %s419 = scalar_lea.vmem %s7, %s418
      %p420 = pneg %p267
      %p421 = pneg %p264
      %s422 = smul.u32 16, %s25
      %p423 = scmp.lt.s32.totalorder %s24, 0
      %s424 = scalar_select %p423, %s24, 0
      %p425 = scmp.lt.s32.totalorder %s422, 31
      %s426 = scalar_select %p425, %s422, 31
      %s427 = smul.addr %s424, 32
      %s428 = sadd.s32 %s426, %s427
      %s429 = smul.addr %s428, 4
      %s430 = scalar_lea.vmem %s8, %s429
      %s431 = smul.u32 16, %s25
      %p432 = scmp.lt.s32.totalorder %s24, 0
      %s433 = scalar_select %p432, %s24, 0
      %p434 = scmp.lt.s32.totalorder %s431, 31
      %s435 = scalar_select %p434, %s431, 31
      %s436 = smul.addr %s433, 32
      %s437 = sadd.s32 %s435, %s436
      %s438 = smul.addr %s437, 4
      %s439 = scalar_lea.vmem %s0, %s438
      %s440 = smul.u32 16, %s25
      %s441 = smul.u32 %s25, 8
      %s442 = ssub.s32 %s441, 1
      %p443 = scmp.gt.s32.totalorder %s442, 0
      %s444 = scalar_select %p443, %s442, 0
      %s445 = smul.u32 2, %s444
      %p446 = scmp.lt.s32.totalorder %s24, 0
      %s447 = scalar_select %p446, %s24, 0
      %p448 = scmp.lt.s32.totalorder %s445, 31
      %s449 = scalar_select %p448, %s445, 31
      %s450 = smul.addr %s447, 32
      %s451 = sadd.s32 %s449, %s450
      %s452 = smul.addr %s451, 4
      %s453 = scalar_lea.vmem %s1, %s452
      %s454 = smul.u32 %s25, 8
      %s455 = ssub.s32 %s454, 1
      %p456 = scmp.gt.s32.totalorder %s455, 0
      %s457 = scalar_select %p456, %s455, 0
      %s458 = smul.u32 2, %s457
      %s459 = smul.u32 %s25, 8
      %s460 = sadd.s32 %s459, 8
      %p461 = scmp.lt.s32.totalorder %s460, 15
      %s462 = scalar_select %p461, %s460, 15
      %s463 = smul.u32 2, %s462
      %p464 = scmp.lt.s32.totalorder %s24, 0
      %s465 = scalar_select %p464, %s24, 0
      %p466 = scmp.lt.s32.totalorder %s463, 31
      %s467 = scalar_select %p466, %s463, 31
      %s468 = smul.addr %s465, 32
      %s469 = sadd.s32 %s467, %s468
      %s470 = smul.addr %s469, 4
      %s471 = scalar_lea.vmem %s2, %s470
      %s472 = smul.u32 %s25, 8
      %s473 = sadd.s32 %s472, 8
      %p474 = scmp.lt.s32.totalorder %s473, 15
      %s475 = scalar_select %p474, %s473, 15
      %s476 = smul.u32 2, %s475
      %s477 = smul.u32 16, %s25
      %p478 = scmp.lt.s32.totalorder %s24, 0
      %s479 = scalar_select %p478, %s24, 0
      %p480 = scmp.lt.s32.totalorder %s477, 31
      %s481 = scalar_select %p480, %s477, 31
      %s482 = smul.addr %s479, 32
      %s483 = sadd.s32 %s481, %s482
      %s484 = smul.addr %s483, 4
      %s485 = scalar_lea.vmem %s7, %s484
      %s486 = smul.u32 16, %s25
      %s487 = smul.u32 16, %s25
      %p488 = scmp.lt.s32.totalorder %s24, 0
      %s489 = scalar_select %p488, %s24, 0
      %p490 = scmp.lt.s32.totalorder %s487, 31
      %s491 = scalar_select %p490, %s487, 31
      %s492 = smul.addr %s489, 32
      %s493 = sadd.s32 %s491, %s492
      %s494 = smul.addr %s493, 4
      %s495 = scalar_lea.vmem %s8, %s494
      %s496 = smul.u32 16, %s25
      %v498 = vld [vmem:[%s439] sm:$0xf]
      %v499 = vld [vmem:[%s439 + $0x4] sm:$0xf]
      %v500 = vld [vmem:[%s439 + $0x8] sm:$0xf]
      %v501 = vld [vmem:[%s439 + $0xc] sm:$0xf]
      %v502 = vld [vmem:[%s439 + $0x10] sm:$0xf]
      %v503 = vld [vmem:[%s439 + $0x14] sm:$0xf]
      %v504 = vld [vmem:[%s439 + $0x18] sm:$0xf]
      %v505 = vld [vmem:[%s439 + $0x1c] sm:$0xf]
      %v506 = vld [vmem:[%s439 + $0x20] sm:$0xf]
      %v507 = vld [vmem:[%s439 + $0x24] sm:$0xf]
      %v508 = vld [vmem:[%s439 + $0x28] sm:$0xf]
      %v509 = vld [vmem:[%s439 + $0x2c] sm:$0xf]
      %v510 = vld [vmem:[%s439 + $0x30] sm:$0xf]
      %v511 = vld [vmem:[%s439 + $0x34] sm:$0xf]
      %v512 = vld [vmem:[%s439 + $0x38] sm:$0xf]
      %v513 = vld [vmem:[%s439 + $0x3c] sm:$0xf]
      %v514 = vld [vmem:[%s3] sm:$0xf]
      %v515 = vld [vmem:[%s3 + $0x4] sm:$0xf]
      %v516 = vld [vmem:[%s3 + $0x8] sm:$0xf]
      %v517 = vld [vmem:[%s3 + $0xc] sm:$0xf]
      %v534 = vunpack.c.l.b16 %v498
      %v535 = vunpack.c.l.b16 %v499
      %v536 = vunpack.c.l.b16 %v500
      %v537 = vunpack.c.l.b16 %v501
      %v538 = vunpack.c.l.b16 %v502
      %v539 = vunpack.c.l.b16 %v503
      %v540 = vunpack.c.l.b16 %v504
      %v541 = vunpack.c.l.b16 %v505
      %v542 = vunpack.c.l.b16 %v506
      %v543 = vunpack.c.l.b16 %v507
      %v544 = vunpack.c.l.b16 %v508
      %v545 = vunpack.c.l.b16 %v509
      %v546 = vunpack.c.l.b16 %v510
      %v547 = vunpack.c.l.b16 %v511
      %v548 = vunpack.c.l.b16 %v512
      %v549 = vunpack.c.l.b16 %v513
      %v550 = vpack.c.b16 %v535, %v534
      %v551 = vpack.c.b16 %v537, %v536
      %v552 = vpack.c.b16 %v539, %v538
      %v553 = vpack.c.b16 %v541, %v540
      %v554 = vpack.c.b16 %v543, %v542
      %v555 = vpack.c.b16 %v545, %v544
      %v556 = vpack.c.b16 %v547, %v546
      %v557 = vpack.c.b16 %v549, %v548
      %v562 = vunpack.c.l.b16 %v514
      %v563 = vunpack.c.l.b16 %v515
      %v564 = vunpack.c.l.b16 %v516
      %v565 = vunpack.c.l.b16 %v517
      %v566 = vpack.c.b16 %v563, %v562
      %v567 = vpack.c.b16 %v565, %v564
      %vm570 = vcmask 261120
      %v572 = vsel %vm570, %v550, 0
      %v575 = vsel %vm570, %v551, 0
      %v578 = vsel %vm570, %v552, 0
      %v581 = vsel %vm570, %v553, 0
      %v584 = vsel %vm570, %v554, 0
      %v587 = vsel %vm570, %v555, 0
      %v590 = vsel %vm570, %v556, 0
      %v593 = vsel %vm570, %v557, 0
      %595 = vmatprep.subr.bf16.mxu0 0
      %596 = vmatpush1.bf16.msra.mxu0 0
      %597 = vmatprep.subr.bf16.mxu0 0
      %598 = vmatpush1.bf16.msra.mxu0 0
      %599 = vmatprep.subr.bf16.mxu0 0
      %600 = vmatpush1.bf16.msra.mxu0 0
      %601 = vmatprep.subr.bf16.mxu0 0
      %602 = vmatpush1.bf16.msra.mxu0 0
      %603 = vmatprep.subr.bf16.mxu0 0
      %604 = vmatpush1.bf16.msra.mxu0 0
      %605 = vmatprep.subr.bf16.mxu0 0
      %606 = vmatpush1.bf16.msra.mxu0 0
      %607 = vmatprep.subr.bf16.mxu0 0
      %608 = vmatpush1.bf16.msra.mxu0 %v567
      %609 = vmatprep.subr.bf16.mxu0 0
      %610 = vmatpush1.bf16.msra.mxu0 %v566
      %611 = vmatprep.subr.bf16.mxu0 0
      %612 = vmatpush2.bf16.msra.mxu0 0
      %613 = vmatprep.subr.bf16.mxu0 0
      %614 = vmatpush2.bf16.msra.mxu0 0
      %615 = vmatprep.subr.bf16.mxu0 0
      %616 = vmatpush2.bf16.msra.mxu0 0
      %617 = vmatprep.subr.bf16.mxu0 0
      %618 = vmatpush2.bf16.msra.mxu0 0
      %619 = vmatprep.subr.bf16.mxu0 0
      %620 = vmatpush2.bf16.msra.mxu0 0
      %621 = vmatprep.subr.bf16.mxu0 0
      %622 = vmatpush2.bf16.msra.mxu0 0
      %623 = vmatprep.subr.bf16.mxu0 0
      %624 = vmatpush2.bf16.msra.mxu0 0
      %625 = vmatprep.subr.bf16.mxu0 0
      %626 = vmatpush2.bf16.msra.mxu0 0
      %627 = vmatprep.mubr.bf16.mxu0 0
      %628 = vmatmul.mubr.bf16.gmra.mxu0 %v572
      %v629 = vpop.f32.mrf.mxu0
      %v630 = vadd.f32 0.0, %v629
      %v631 = vpop.f32.mrf.mxu0
      %v632 = vpop.f32.mrf.mxu0
      %v633 = vadd.f32 0.0, %v632
      %v634 = vpop.f32.mrf.mxu0
      %635 = vmatprep.mubr.bf16.mxu0 0
      %636 = vmatmul.mubr.bf16.gmra.mxu0 %v575
      %v637 = vpop.f32.mrf.mxu0
      %v638 = vadd.f32 0.0, %v637
      %v639 = vpop.f32.mrf.mxu0
      %v640 = vpop.f32.mrf.mxu0
      %v641 = vadd.f32 0.0, %v640
      %v642 = vpop.f32.mrf.mxu0
      %643 = vmatprep.mubr.bf16.mxu0 0
      %644 = vmatmul.mubr.bf16.gmra.mxu0 %v578
      %v645 = vpop.f32.mrf.mxu0
      %v646 = vadd.f32 0.0, %v645
      %v647 = vpop.f32.mrf.mxu0
      %v648 = vpop.f32.mrf.mxu0
      %v649 = vadd.f32 0.0, %v648
      %v650 = vpop.f32.mrf.mxu0
      %651 = vmatprep.mubr.bf16.mxu0 0
      %652 = vmatmul.mubr.bf16.gmra.mxu0 %v581
      %v653 = vpop.f32.mrf.mxu0
      %v654 = vadd.f32 0.0, %v653
      %v655 = vpop.f32.mrf.mxu0
      %v656 = vpop.f32.mrf.mxu0
      %v657 = vadd.f32 0.0, %v656
      %v658 = vpop.f32.mrf.mxu0
      %659 = vmatprep.mubr.bf16.mxu0 0
      %660 = vmatmul.mubr.bf16.gmra.mxu0 %v584
      %v661 = vpop.f32.mrf.mxu0
      %v662 = vadd.f32 0.0, %v661
      %v663 = vpop.f32.mrf.mxu0
      %v664 = vpop.f32.mrf.mxu0
      %v665 = vadd.f32 0.0, %v664
      %v666 = vpop.f32.mrf.mxu0
      %667 = vmatprep.mubr.bf16.mxu0 0
      %668 = vmatmul.mubr.bf16.gmra.mxu0 %v587
      %v669 = vpop.f32.mrf.mxu0
      %v670 = vadd.f32 0.0, %v669
      %v671 = vpop.f32.mrf.mxu0
      %v672 = vpop.f32.mrf.mxu0
      %v673 = vadd.f32 0.0, %v672
      %v674 = vpop.f32.mrf.mxu0
      %675 = vmatprep.mubr.bf16.mxu0 0
      %676 = vmatmul.mubr.bf16.gmra.mxu0 %v590
      %v677 = vpop.f32.mrf.mxu0
      %v678 = vadd.f32 0.0, %v677
      %v679 = vpop.f32.mrf.mxu0
      %v680 = vpop.f32.mrf.mxu0
      %v681 = vadd.f32 0.0, %v680
      %v682 = vpop.f32.mrf.mxu0
      %683 = vmatprep.mubr.bf16.mxu0 0
      %684 = vmatmul.mubr.bf16.gmra.mxu0 %v593
      %v685 = vpop.f32.mrf.mxu0
      %v686 = vadd.f32 0.0, %v685
      %v687 = vpop.f32.mrf.mxu0
      %v688 = vpop.f32.mrf.mxu0
      %v689 = vadd.f32 0.0, %v688
      %v690 = vpop.f32.mrf.mxu0
      %691 = vdwg.mxu0
      %v692 = vld [vmem:[%s4] sm:$0x1]
      %v694 = vlaneseq
      %v695 = vshrl.u32 %v694, 7
      %v696 = vsub.s32 0, %v695
      %v697 = vrot.slane %v692, %v696
      %698 = vrot.lane.b32.xlu0 %v697, 32
      %v699 = vpop.permute.xlu0 %698
      %v701 = vadd.f32 %v630, %v699
      %v702 = vadd.f32 %v633, %v699
      %v703 = vadd.f32 %v638, %v699
      %v704 = vadd.f32 %v641, %v699
      %v705 = vadd.f32 %v646, %v699
      %v706 = vadd.f32 %v649, %v699
      %v707 = vadd.f32 %v654, %v699
      %v708 = vadd.f32 %v657, %v699
      %v709 = vadd.f32 %v662, %v699
      %v710 = vadd.f32 %v665, %v699
      %v711 = vadd.f32 %v670, %v699
      %v712 = vadd.f32 %v673, %v699
      %v713 = vadd.f32 %v678, %v699
      %v714 = vadd.f32 %v681, %v699
      %v715 = vadd.f32 %v686, %v699
      %v716 = vadd.f32 %v689, %v699
      %v717 = vmul.f32 %v701, 0.5
      %v718 = vmul.f32 %v702, 0.5
      %v719 = vmul.f32 %v703, 0.5
      %v720 = vmul.f32 %v704, 0.5
      %v721 = vmul.f32 %v705, 0.5
      %v722 = vmul.f32 %v706, 0.5
      %v723 = vmul.f32 %v707, 0.5
      %v724 = vmul.f32 %v708, 0.5
      %v725 = vmul.f32 %v709, 0.5
      %v726 = vmul.f32 %v710, 0.5
      %v727 = vmul.f32 %v711, 0.5
      %v728 = vmul.f32 %v712, 0.5
      %v729 = vmul.f32 %v713, 0.5
      %v730 = vmul.f32 %v714, 0.5
      %v731 = vmul.f32 %v715, 0.5
      %v732 = vmul.f32 %v716, 0.5
      %v733 = vmul.f32 %v701, 0.044715
      %v734 = vmul.f32 %v702, 0.044715
      %v735 = vmul.f32 %v703, 0.044715
      %v736 = vmul.f32 %v704, 0.044715
      %v737 = vmul.f32 %v705, 0.044715
      %v738 = vmul.f32 %v706, 0.044715
      %v739 = vmul.f32 %v707, 0.044715
      %v740 = vmul.f32 %v708, 0.044715
      %v741 = vmul.f32 %v709, 0.044715
      %v742 = vmul.f32 %v710, 0.044715
      %v743 = vmul.f32 %v711, 0.044715
      %v744 = vmul.f32 %v712, 0.044715
      %v745 = vmul.f32 %v713, 0.044715
      %v746 = vmul.f32 %v714, 0.044715
      %v747 = vmul.f32 %v715, 0.044715
      %v748 = vmul.f32 %v716, 0.044715
      %v749 = vmul.f32 %v733, %v701
      %v750 = vmul.f32 %v734, %v702
      %v751 = vmul.f32 %v735, %v703
      %v752 = vmul.f32 %v736, %v704
      %v753 = vmul.f32 %v737, %v705
      %v754 = vmul.f32 %v738, %v706
      %v755 = vmul.f32 %v739, %v707
      %v756 = vmul.f32 %v740, %v708
      %v757 = vmul.f32 %v741, %v709
      %v758 = vmul.f32 %v742, %v710
      %v759 = vmul.f32 %v743, %v711
      %v760 = vmul.f32 %v744, %v712
      %v761 = vmul.f32 %v745, %v713
      %v762 = vmul.f32 %v746, %v714
      %v763 = vmul.f32 %v747, %v715
      %v764 = vmul.f32 %v748, %v716
      %v765 = vmul.f32 %v749, %v701
      %v766 = vmul.f32 %v750, %v702
      %v767 = vmul.f32 %v751, %v703
      %v768 = vmul.f32 %v752, %v704
      %v769 = vmul.f32 %v753, %v705
      %v770 = vmul.f32 %v754, %v706
      %v771 = vmul.f32 %v755, %v707
      %v772 = vmul.f32 %v756, %v708
      %v773 = vmul.f32 %v757, %v709
      %v774 = vmul.f32 %v758, %v710
      %v775 = vmul.f32 %v759, %v711
      %v776 = vmul.f32 %v760, %v712
      %v777 = vmul.f32 %v761, %v713
      %v778 = vmul.f32 %v762, %v714
      %v779 = vmul.f32 %v763, %v715
      %v780 = vmul.f32 %v764, %v716
      %v781 = vadd.f32 %v701, %v765
      %v782 = vadd.f32 %v702, %v766
      %v783 = vadd.f32 %v703, %v767
      %v784 = vadd.f32 %v704, %v768
      %v785 = vadd.f32 %v705, %v769
      %v786 = vadd.f32 %v706, %v770
      %v787 = vadd.f32 %v707, %v771
      %v788 = vadd.f32 %v708, %v772
      %v789 = vadd.f32 %v709, %v773
      %v790 = vadd.f32 %v710, %v774
      %v791 = vadd.f32 %v711, %v775
      %v792 = vadd.f32 %v712, %v776
      %v793 = vadd.f32 %v713, %v777
      %v794 = vadd.f32 %v714, %v778
      %v795 = vadd.f32 %v715, %v779
      %v796 = vadd.f32 %v716, %v780
      %v797 = vmul.f32 %v781, 0.7978846
      %v798 = vmul.f32 %v782, 0.7978846
      %v799 = vmul.f32 %v783, 0.7978846
      %v800 = vmul.f32 %v784, 0.7978846
      %v801 = vmul.f32 %v785, 0.7978846
      %v802 = vmul.f32 %v786, 0.7978846
      %v803 = vmul.f32 %v787, 0.7978846
      %v804 = vmul.f32 %v788, 0.7978846
      %v805 = vmul.f32 %v789, 0.7978846
      %v806 = vmul.f32 %v790, 0.7978846
      %v807 = vmul.f32 %v791, 0.7978846
      %v808 = vmul.f32 %v792, 0.7978846
      %v809 = vmul.f32 %v793, 0.7978846
      %v810 = vmul.f32 %v794, 0.7978846
      %v811 = vmul.f32 %v795, 0.7978846
      %v812 = vmul.f32 %v796, 0.7978846
      %v813 = vtanh.pop %v797
      %v814 = vtanh.pop %v798
      %v815 = vtanh.pop %v799
      %v816 = vtanh.pop %v800
      %v817 = vtanh.pop %v801
      %v818 = vtanh.pop %v802
      %v819 = vtanh.pop %v803
      %v820 = vtanh.pop %v804
      %v821 = vtanh.pop %v805
      %v822 = vtanh.pop %v806
      %v823 = vtanh.pop %v807
      %v824 = vtanh.pop %v808
      %v825 = vtanh.pop %v809
      %v826 = vtanh.pop %v810
      %v827 = vtanh.pop %v811
      %v828 = vtanh.pop %v812
      %v829 = vadd.f32 %v813, 1.0
      %v830 = vadd.f32 %v814, 1.0
      %v831 = vadd.f32 %v815, 1.0
      %v832 = vadd.f32 %v816, 1.0
      %v833 = vadd.f32 %v817, 1.0
      %v834 = vadd.f32 %v818, 1.0
      %v835 = vadd.f32 %v819, 1.0
      %v836 = vadd.f32 %v820, 1.0
      %v837 = vadd.f32 %v821, 1.0
      %v838 = vadd.f32 %v822, 1.0
      %v839 = vadd.f32 %v823, 1.0
      %v840 = vadd.f32 %v824, 1.0
      %v841 = vadd.f32 %v825, 1.0
      %v842 = vadd.f32 %v826, 1.0
      %v843 = vadd.f32 %v827, 1.0
      %v844 = vadd.f32 %v828, 1.0
      %v845 = vmul.f32 %v717, %v829
      %v846 = vmul.f32 %v718, %v830
      %v847 = vmul.f32 %v719, %v831
      %v848 = vmul.f32 %v720, %v832
      %v849 = vmul.f32 %v721, %v833
      %v850 = vmul.f32 %v722, %v834
      %v851 = vmul.f32 %v723, %v835
      %v852 = vmul.f32 %v724, %v836
      %v853 = vmul.f32 %v725, %v837
      %v854 = vmul.f32 %v726, %v838
      %v855 = vmul.f32 %v727, %v839
      %v856 = vmul.f32 %v728, %v840
      %v857 = vmul.f32 %v729, %v841
      %v858 = vmul.f32 %v730, %v842
      %v859 = vmul.f32 %v731, %v843
      %v860 = vmul.f32 %v732, %v844
      %v861 = vpack.c.bf16 %v846, %v845
      %v862 = vpack.c.bf16 %v848, %v847
      %v863 = vpack.c.bf16 %v850, %v849
      %v864 = vpack.c.bf16 %v852, %v851
      %v865 = vpack.c.bf16 %v854, %v853
      %v866 = vpack.c.bf16 %v856, %v855
      %v867 = vpack.c.bf16 %v858, %v857
      %v868 = vpack.c.bf16 %v860, %v859
      %v877 = vunpack.c.l.b16 %v861
      %v878 = vunpack.c.h.b16 %v861
      %v879 = vunpack.c.l.b16 %v862
      %v880 = vunpack.c.h.b16 %v862
      %v881 = vunpack.c.l.b16 %v863
      %v882 = vunpack.c.h.b16 %v863
      %v883 = vunpack.c.l.b16 %v864
      %v884 = vunpack.c.h.b16 %v864
      %v885 = vunpack.c.l.b16 %v865
      %v886 = vunpack.c.h.b16 %v865
      %v887 = vunpack.c.l.b16 %v866
      %v888 = vunpack.c.h.b16 %v866
      %v889 = vunpack.c.l.b16 %v867
      %v890 = vunpack.c.h.b16 %v867
      %v891 = vunpack.c.l.b16 %v868
      %v892 = vunpack.c.h.b16 %v868
      %v893 = vpack.c.b16 %v877, %v877
      %v894 = vpack.c.b16 %v878, %v878
      %v895 = vpack.c.b16 %v879, %v879
      %v896 = vpack.c.b16 %v880, %v880
      %v897 = vpack.c.b16 %v881, %v881
      %v898 = vpack.c.b16 %v882, %v882
      %v899 = vpack.c.b16 %v883, %v883
      %v900 = vpack.c.b16 %v884, %v884
      %v901 = vpack.c.b16 %v885, %v885
      %v902 = vpack.c.b16 %v886, %v886
      %v903 = vpack.c.b16 %v887, %v887
      %v904 = vpack.c.b16 %v888, %v888
      %v905 = vpack.c.b16 %v889, %v889
      %v906 = vpack.c.b16 %v890, %v890
      %v907 = vpack.c.b16 %v891, %v891
      %v908 = vpack.c.b16 %v892, %v892
      %909 = vrot.lane.b32.xlu0 %v893, 96
      %v910 = vpop.permute.xlu0 %909
      %911 = vrot.lane.b32.xlu0 %v894, 96
      %v912 = vpop.permute.xlu0 %911
      %913 = vrot.lane.b32.xlu0 %v895, 96
      %v914 = vpop.permute.xlu0 %913
      %915 = vrot.lane.b32.xlu0 %v896, 96
      %v916 = vpop.permute.xlu0 %915
      %917 = vrot.lane.b32.xlu0 %v897, 96
      %v918 = vpop.permute.xlu0 %917
      %919 = vrot.lane.b32.xlu0 %v898, 96
      %v920 = vpop.permute.xlu0 %919
      %921 = vrot.lane.b32.xlu0 %v899, 96
      %v922 = vpop.permute.xlu0 %921
      %923 = vrot.lane.b32.xlu0 %v900, 96
      %v924 = vpop.permute.xlu0 %923
      %925 = vrot.lane.b32.xlu0 %v901, 96
      %v926 = vpop.permute.xlu0 %925
      %927 = vrot.lane.b32.xlu0 %v902, 96
      %v928 = vpop.permute.xlu0 %927
      %929 = vrot.lane.b32.xlu0 %v903, 96
      %v930 = vpop.permute.xlu0 %929
      %931 = vrot.lane.b32.xlu0 %v904, 96
      %v932 = vpop.permute.xlu0 %931
      %933 = vrot.lane.b32.xlu0 %v905, 96
      %v934 = vpop.permute.xlu0 %933
      %935 = vrot.lane.b32.xlu0 %v906, 96
      %v936 = vpop.permute.xlu0 %935
      %937 = vrot.lane.b32.xlu0 %v907, 96
      %v938 = vpop.permute.xlu0 %937
      %939 = vrot.lane.b32.xlu0 %v908, 96
      %v940 = vpop.permute.xlu0 %939
      %vm957 = vcmask 125952
      %958 = vst.msk [vmem:[%s485] sm:$0xf] %vm957, %v910
      %959 = vst.msk [vmem:[%s485 + $0x4] sm:$0xf] %vm957, %v912
      %960 = vst.msk [vmem:[%s485 + $0x8] sm:$0xf] %vm957, %v914
      %961 = vst.msk [vmem:[%s485 + $0xc] sm:$0xf] %vm957, %v916
      %962 = vst.msk [vmem:[%s485 + $0x10] sm:$0xf] %vm957, %v918
      %963 = vst.msk [vmem:[%s485 + $0x14] sm:$0xf] %vm957, %v920
      %964 = vst.msk [vmem:[%s485 + $0x18] sm:$0xf] %vm957, %v922
      %965 = vst.msk [vmem:[%s485 + $0x1c] sm:$0xf] %vm957, %v924
      %966 = vst.msk [vmem:[%s485 + $0x20] sm:$0xf] %vm957, %v926
      %967 = vst.msk [vmem:[%s485 + $0x24] sm:$0xf] %vm957, %v928
      %968 = vst.msk [vmem:[%s485 + $0x28] sm:$0xf] %vm957, %v930
      %969 = vst.msk [vmem:[%s485 + $0x2c] sm:$0xf] %vm957, %v932
      %970 = vst.msk [vmem:[%s485 + $0x30] sm:$0xf] %vm957, %v934
      %971 = vst.msk [vmem:[%s485 + $0x34] sm:$0xf] %vm957, %v936
      %972 = vst.msk [vmem:[%s485 + $0x38] sm:$0xf] %vm957, %v938
      %973 = vst.msk [vmem:[%s485 + $0x3c] sm:$0xf] %vm957, %v940
      %p974 = scmp.gt.s32.totalorder %s25, 0
      %s975 = scalar_select %p974, 1, 0
      %s976 = scvt.s32.f32 %s975
      %p977 = scmp.lt.s32.totalorder %s25, 1
      %s978 = scalar_select %p977, 1, 0
      %s979 = scvt.s32.f32 %s978
      %v980 = vld [vmem:[%s453] sm:$0xf]
      %v981 = vld [vmem:[%s453 + $0x4] sm:$0xf]
      %v984 = vunpack.c.l.b16 %v980
      %v985 = vunpack.c.l.b16 %v981
      %v986 = vpack.c.b16 %v985, %v984
      %v988 = vsel %vm570, %v986, 0
      %990 = vmatprep.subr.bf16.mxu0 0
      %991 = vmatpush1.bf16.msra.mxu0 0
      %992 = vmatprep.subr.bf16.mxu0 0
      %993 = vmatpush1.bf16.msra.mxu0 0
      %994 = vmatprep.subr.bf16.mxu0 0
      %995 = vmatpush1.bf16.msra.mxu0 0
      %996 = vmatprep.subr.bf16.mxu0 0
      %997 = vmatpush1.bf16.msra.mxu0 0
      %998 = vmatprep.subr.bf16.mxu0 0
      %999 = vmatpush1.bf16.msra.mxu0 0
      %1000 = vmatprep.subr.bf16.mxu0 0
      %1001 = vmatpush1.bf16.msra.mxu0 0
      %1002 = vmatprep.subr.bf16.mxu0 0
      %1003 = vmatpush1.bf16.msra.mxu0 %v567
      %1004 = vmatprep.subr.bf16.mxu0 0
      %1005 = vmatpush1.bf16.msra.mxu0 %v566
      %1006 = vmatprep.subr.bf16.mxu0 0
      %1007 = vmatpush2.bf16.msra.mxu0 0
      %1008 = vmatprep.subr.bf16.mxu0 0
      %1009 = vmatpush2.bf16.msra.mxu0 0
      %1010 = vmatprep.subr.bf16.mxu0 0
      %1011 = vmatpush2.bf16.msra.mxu0 0
      %1012 = vmatprep.subr.bf16.mxu0 0
      %1013 = vmatpush2.bf16.msra.mxu0 0
      %1014 = vmatprep.subr.bf16.mxu0 0
      %1015 = vmatpush2.bf16.msra.mxu0 0
      %1016 = vmatprep.subr.bf16.mxu0 0
      %1017 = vmatpush2.bf16.msra.mxu0 0
      %1018 = vmatprep.subr.bf16.mxu0 0
      %1019 = vmatpush2.bf16.msra.mxu0 0
      %1020 = vmatprep.subr.bf16.mxu0 0
      %1021 = vmatpush2.bf16.msra.mxu0 0
      %1022 = vmatprep.mubr.bf16.mxu0 0
      %1023 = vmatmul.mubr.bf16.gmra.mxu0 %v988
      %v1024 = vpop.f32.mrf.mxu0
      %v1025 = vadd.f32 0.0, %v1024
      %v1026 = vpop.f32.mrf.mxu0
      %v1027 = vpop.f32.mrf.mxu0
      %v1028 = vadd.f32 0.0, %v1027
      %v1029 = vpop.f32.mrf.mxu0
      %1030 = vdwg.mxu0
      %v1031 = vstv %s976
      %v1032 = vmul.f32 %v1025, %v1031
      %v1033 = vmul.f32 %v1028, %v1031
      %v1034 = vld [vmem:[%s471] sm:$0xf]
      %v1035 = vld [vmem:[%s471 + $0x4] sm:$0xf]
      %v1038 = vunpack.c.l.b16 %v1034
      %v1039 = vunpack.c.l.b16 %v1035
      %v1040 = vpack.c.b16 %v1039, %v1038
      %v1042 = vsel %vm570, %v1040, 0
      %1044 = vmatprep.subr.bf16.mxu0 0
      %1045 = vmatpush1.bf16.msra.mxu0 0
      %1046 = vmatprep.subr.bf16.mxu0 0
      %1047 = vmatpush1.bf16.msra.mxu0 0
      %1048 = vmatprep.subr.bf16.mxu0 0
      %1049 = vmatpush1.bf16.msra.mxu0 0
      %1050 = vmatprep.subr.bf16.mxu0 0
      %1051 = vmatpush1.bf16.msra.mxu0 0
      %1052 = vmatprep.subr.bf16.mxu0 0
      %1053 = vmatpush1.bf16.msra.mxu0 0
      %1054 = vmatprep.subr.bf16.mxu0 0
      %1055 = vmatpush1.bf16.msra.mxu0 0
      %1056 = vmatprep.subr.bf16.mxu0 0
      %1057 = vmatpush1.bf16.msra.mxu0 %v567
      %1058 = vmatprep.subr.bf16.mxu0 0
      %1059 = vmatpush1.bf16.msra.mxu0 %v566
      %1060 = vmatprep.subr.bf16.mxu0 0
      %1061 = vmatpush2.bf16.msra.mxu0 0
      %1062 = vmatprep.subr.bf16.mxu0 0
      %1063 = vmatpush2.bf16.msra.mxu0 0
      %1064 = vmatprep.subr.bf16.mxu0 0
      %1065 = vmatpush2.bf16.msra.mxu0 0
      %1066 = vmatprep.subr.bf16.mxu0 0
      %1067 = vmatpush2.bf16.msra.mxu0 0
      %1068 = vmatprep.subr.bf16.mxu0 0
      %1069 = vmatpush2.bf16.msra.mxu0 0
      %1070 = vmatprep.subr.bf16.mxu0 0
      %1071 = vmatpush2.bf16.msra.mxu0 0
      %1072 = vmatprep.subr.bf16.mxu0 0
      %1073 = vmatpush2.bf16.msra.mxu0 0
      %1074 = vmatprep.subr.bf16.mxu0 0
      %1075 = vmatpush2.bf16.msra.mxu0 0
      %1076 = vmatprep.mubr.bf16.mxu0 0
      %1077 = vmatmul.mubr.bf16.gmra.mxu0 %v1042
      %v1078 = vpop.f32.mrf.mxu0
      %v1079 = vadd.f32 0.0, %v1078
      %v1080 = vpop.f32.mrf.mxu0
      %v1081 = vpop.f32.mrf.mxu0
      %v1082 = vadd.f32 0.0, %v1081
      %v1083 = vpop.f32.mrf.mxu0
      %1084 = vdwg.mxu0
      %v1085 = vstv %s979
      %v1086 = vmul.f32 %v1079, %v1085
      %v1087 = vmul.f32 %v1082, %v1085
      %v1088 = vld [vmem:[%s5] sm:$0xff]
      %v1089 = vld [vmem:[%s5 + $0x8] sm:$0x1]
      %v1090 = vlaneseq
      %v1091 = vshrl.u32 %v1090, 7
      %v1092 = vsub.s32 0, %v1091
      %v1093 = vrot.slane %v1088, %v1092
      %v1094 = vmul.f32 %v1032, %v1093
      %v1095 = vmul.f32 %v1033, %v1093
      %v1096 = vmul.f32 %v630, %v1093
      %v1097 = vmul.f32 %v633, %v1093
      %v1098 = vmul.f32 %v638, %v1093
      %v1099 = vmul.f32 %v641, %v1093
      %v1100 = vmul.f32 %v646, %v1093
      %v1101 = vmul.f32 %v649, %v1093
      %v1102 = vmul.f32 %v654, %v1093
      %v1103 = vmul.f32 %v657, %v1093
      %v1104 = vmul.f32 %v662, %v1093
      %v1105 = vmul.f32 %v665, %v1093
      %v1106 = vmul.f32 %v670, %v1093
      %v1107 = vmul.f32 %v673, %v1093
      %v1108 = vmul.f32 %v678, %v1093
      %v1109 = vmul.f32 %v681, %v1093
      %v1110 = vlaneseq
      %v1111 = vshrl.u32 %v1110, 7
      %v1112 = vsub.s32 3, %v1111
      %v1113 = vrot.slane %v1088, %v1112
      %v1114 = vmul.f32 %v630, %v1113
      %v1115 = vmul.f32 %v633, %v1113
      %v1116 = vmul.f32 %v638, %v1113
      %v1117 = vmul.f32 %v641, %v1113
      %v1118 = vmul.f32 %v646, %v1113
      %v1119 = vmul.f32 %v649, %v1113
      %v1120 = vmul.f32 %v654, %v1113
      %v1121 = vmul.f32 %v657, %v1113
      %v1122 = vmul.f32 %v662, %v1113
      %v1123 = vmul.f32 %v665, %v1113
      %v1124 = vmul.f32 %v670, %v1113
      %v1125 = vmul.f32 %v673, %v1113
      %v1126 = vmul.f32 %v678, %v1113
      %v1127 = vmul.f32 %v681, %v1113
      %v1128 = vmul.f32 %v686, %v1113
      %v1129 = vmul.f32 %v689, %v1113
      %v1130 = vadd.f32 %v1094, %v1114
      %v1131 = vadd.f32 %v1095, %v1115
      %v1132 = vadd.f32 %v1096, %v1116
      %v1133 = vadd.f32 %v1097, %v1117
      %v1134 = vadd.f32 %v1098, %v1118
      %v1135 = vadd.f32 %v1099, %v1119
      %v1136 = vadd.f32 %v1100, %v1120
      %v1137 = vadd.f32 %v1101, %v1121
      %v1138 = vadd.f32 %v1102, %v1122
      %v1139 = vadd.f32 %v1103, %v1123
      %v1140 = vadd.f32 %v1104, %v1124
      %v1141 = vadd.f32 %v1105, %v1125
      %v1142 = vadd.f32 %v1106, %v1126
      %v1143 = vadd.f32 %v1107, %v1127
      %v1144 = vadd.f32 %v1108, %v1128
      %v1145 = vadd.f32 %v1109, %v1129
      %v1146 = vlaneseq
      %v1147 = vshrl.u32 %v1146, 7
      %v1148 = vsub.s32 6, %v1147
      %v1149 = vrot.slane %v1088, %v1148
      %v1150 = vmul.f32 %v638, %v1149
      %v1151 = vmul.f32 %v641, %v1149
      %v1152 = vmul.f32 %v646, %v1149
      %v1153 = vmul.f32 %v649, %v1149
      %v1154 = vmul.f32 %v654, %v1149
      %v1155 = vmul.f32 %v657, %v1149
      %v1156 = vmul.f32 %v662, %v1149
      %v1157 = vmul.f32 %v665, %v1149
      %v1158 = vmul.f32 %v670, %v1149
      %v1159 = vmul.f32 %v673, %v1149
      %v1160 = vmul.f32 %v678, %v1149
      %v1161 = vmul.f32 %v681, %v1149
      %v1162 = vmul.f32 %v686, %v1149
      %v1163 = vmul.f32 %v689, %v1149
      %v1164 = vmul.f32 %v1086, %v1149
      %v1165 = vmul.f32 %v1087, %v1149
      %v1166 = vadd.f32 %v1130, %v1150
      %v1167 = vadd.f32 %v1131, %v1151
      %v1168 = vadd.f32 %v1132, %v1152
      %v1169 = vadd.f32 %v1133, %v1153
      %v1170 = vadd.f32 %v1134, %v1154
      %v1171 = vadd.f32 %v1135, %v1155
      %v1172 = vadd.f32 %v1136, %v1156
      %v1173 = vadd.f32 %v1137, %v1157
      %v1174 = vadd.f32 %v1138, %v1158
      %v1175 = vadd.f32 %v1139, %v1159
      %v1176 = vadd.f32 %v1140, %v1160
      %v1177 = vadd.f32 %v1141, %v1161
      %v1178 = vadd.f32 %v1142, %v1162
      %v1179 = vadd.f32 %v1143, %v1163
      %v1180 = vadd.f32 %v1144, %v1164
      %v1181 = vadd.f32 %v1145, %v1165
      %v1182 = vlaneseq
      %v1183 = vshrl.u32 %v1182, 7
      %v1184 = vsub.s32 1, %v1183
      %v1185 = vrot.slane %v1088, %v1184
      %v1186 = vmul.f32 %v1032, %v1185
      %v1187 = vmul.f32 %v1033, %v1185
      %v1188 = vmul.f32 %v630, %v1185
      %v1189 = vmul.f32 %v633, %v1185
      %v1190 = vmul.f32 %v638, %v1185
      %v1191 = vmul.f32 %v641, %v1185
      %v1192 = vmul.f32 %v646, %v1185
      %v1193 = vmul.f32 %v649, %v1185
      %v1194 = vmul.f32 %v654, %v1185
      %v1195 = vmul.f32 %v657, %v1185
      %v1196 = vmul.f32 %v662, %v1185
      %v1197 = vmul.f32 %v665, %v1185
      %v1198 = vmul.f32 %v670, %v1185
      %v1199 = vmul.f32 %v673, %v1185
      %v1200 = vmul.f32 %v678, %v1185
      %v1201 = vmul.f32 %v681, %v1185
      %v1202 = vlaneseq
      %v1203 = vshrl.u32 %v1202, 7
      %v1204 = vsub.s32 4, %v1203
      %v1205 = vrot.slane %v1088, %v1204
      %v1206 = vmul.f32 %v630, %v1205
      %v1207 = vmul.f32 %v633, %v1205
      %v1208 = vmul.f32 %v638, %v1205
      %v1209 = vmul.f32 %v641, %v1205
      %v1210 = vmul.f32 %v646, %v1205
      %v1211 = vmul.f32 %v649, %v1205
      %v1212 = vmul.f32 %v654, %v1205
      %v1213 = vmul.f32 %v657, %v1205
      %v1214 = vmul.f32 %v662, %v1205
      %v1215 = vmul.f32 %v665, %v1205
      %v1216 = vmul.f32 %v670, %v1205
      %v1217 = vmul.f32 %v673, %v1205
      %v1218 = vmul.f32 %v678, %v1205
      %v1219 = vmul.f32 %v681, %v1205
      %v1220 = vmul.f32 %v686, %v1205
      %v1221 = vmul.f32 %v689, %v1205
      %v1222 = vadd.f32 %v1186, %v1206
      %v1223 = vadd.f32 %v1187, %v1207
      %v1224 = vadd.f32 %v1188, %v1208
      %v1225 = vadd.f32 %v1189, %v1209
      %v1226 = vadd.f32 %v1190, %v1210
      %v1227 = vadd.f32 %v1191, %v1211
      %v1228 = vadd.f32 %v1192, %v1212
      %v1229 = vadd.f32 %v1193, %v1213
      %v1230 = vadd.f32 %v1194, %v1214
      %v1231 = vadd.f32 %v1195, %v1215
      %v1232 = vadd.f32 %v1196, %v1216
      %v1233 = vadd.f32 %v1197, %v1217
      %v1234 = vadd.f32 %v1198, %v1218
      %v1235 = vadd.f32 %v1199, %v1219
      %v1236 = vadd.f32 %v1200, %v1220
      %v1237 = vadd.f32 %v1201, %v1221
      %v1238 = vlaneseq
      %v1239 = vshrl.u32 %v1238, 7
      %v1240 = vsub.s32 7, %v1239
      %v1241 = vrot.slane %v1088, %v1240
      %v1242 = vmul.f32 %v638, %v1241
      %v1243 = vmul.f32 %v641, %v1241
      %v1244 = vmul.f32 %v646, %v1241
      %v1245 = vmul.f32 %v649, %v1241
      %v1246 = vmul.f32 %v654, %v1241
      %v1247 = vmul.f32 %v657, %v1241
      %v1248 = vmul.f32 %v662, %v1241
      %v1249 = vmul.f32 %v665, %v1241
      %v1250 = vmul.f32 %v670, %v1241
      %v1251 = vmul.f32 %v673, %v1241
      %v1252 = vmul.f32 %v678, %v1241
      %v1253 = vmul.f32 %v681, %v1241
      %v1254 = vmul.f32 %v686, %v1241
      %v1255 = vmul.f32 %v689, %v1241
      %v1256 = vmul.f32 %v1086, %v1241
      %v1257 = vmul.f32 %v1087, %v1241
      %v1258 = vadd.f32 %v1222, %v1242
      %v1259 = vadd.f32 %v1223, %v1243
      %v1260 = vadd.f32 %v1224, %v1244
      %v1261 = vadd.f32 %v1225, %v1245
      %v1262 = vadd.f32 %v1226, %v1246
      %v1263 = vadd.f32 %v1227, %v1247
      %v1264 = vadd.f32 %v1228, %v1248
      %v1265 = vadd.f32 %v1229, %v1249
      %v1266 = vadd.f32 %v1230, %v1250
      %v1267 = vadd.f32 %v1231, %v1251
      %v1268 = vadd.f32 %v1232, %v1252
      %v1269 = vadd.f32 %v1233, %v1253
      %v1270 = vadd.f32 %v1234, %v1254
      %v1271 = vadd.f32 %v1235, %v1255
      %v1272 = vadd.f32 %v1236, %v1256
      %v1273 = vadd.f32 %v1237, %v1257
      %v1274 = vlaneseq
      %v1275 = vshrl.u32 %v1274, 7
      %v1276 = vsub.s32 2, %v1275
      %v1277 = vrot.slane %v1088, %v1276
      %v1278 = vmul.f32 %v1032, %v1277
      %v1279 = vmul.f32 %v1033, %v1277
      %v1280 = vmul.f32 %v630, %v1277
      %v1281 = vmul.f32 %v633, %v1277
      %v1282 = vmul.f32 %v638, %v1277
      %v1283 = vmul.f32 %v641, %v1277
      %v1284 = vmul.f32 %v646, %v1277
      %v1285 = vmul.f32 %v649, %v1277
      %v1286 = vmul.f32 %v654, %v1277
      %v1287 = vmul.f32 %v657, %v1277
      %v1288 = vmul.f32 %v662, %v1277
      %v1289 = vmul.f32 %v665, %v1277
      %v1290 = vmul.f32 %v670, %v1277
      %v1291 = vmul.f32 %v673, %v1277
      %v1292 = vmul.f32 %v678, %v1277
      %v1293 = vmul.f32 %v681, %v1277
      %v1294 = vlaneseq
      %v1295 = vshrl.u32 %v1294, 7
      %v1296 = vsub.s32 5, %v1295
      %v1297 = vrot.slane %v1088, %v1296
      %v1298 = vmul.f32 %v630, %v1297
      %v1299 = vmul.f32 %v633, %v1297
      %v1300 = vmul.f32 %v638, %v1297
      %v1301 = vmul.f32 %v641, %v1297
      %v1302 = vmul.f32 %v646, %v1297
      %v1303 = vmul.f32 %v649, %v1297
      %v1304 = vmul.f32 %v654, %v1297
      %v1305 = vmul.f32 %v657, %v1297
      %v1306 = vmul.f32 %v662, %v1297
      %v1307 = vmul.f32 %v665, %v1297
      %v1308 = vmul.f32 %v670, %v1297
      %v1309 = vmul.f32 %v673, %v1297
      %v1310 = vmul.f32 %v678, %v1297
      %v1311 = vmul.f32 %v681, %v1297
      %v1312 = vmul.f32 %v686, %v1297
      %v1313 = vmul.f32 %v689, %v1297
      %v1314 = vadd.f32 %v1278, %v1298
      %v1315 = vadd.f32 %v1279, %v1299
      %v1316 = vadd.f32 %v1280, %v1300
      %v1317 = vadd.f32 %v1281, %v1301
      %v1318 = vadd.f32 %v1282, %v1302
      %v1319 = vadd.f32 %v1283, %v1303
      %v1320 = vadd.f32 %v1284, %v1304
      %v1321 = vadd.f32 %v1285, %v1305
      %v1322 = vadd.f32 %v1286, %v1306
      %v1323 = vadd.f32 %v1287, %v1307
      %v1324 = vadd.f32 %v1288, %v1308
      %v1325 = vadd.f32 %v1289, %v1309
      %v1326 = vadd.f32 %v1290, %v1310
      %v1327 = vadd.f32 %v1291, %v1311
      %v1328 = vadd.f32 %v1292, %v1312
      %v1329 = vadd.f32 %v1293, %v1313
      %v1330 = vlaneseq
      %v1331 = vshrl.u32 %v1330, 7
      %v1332 = vsub.s32 0, %v1331
      %v1333 = vrot.slane %v1089, %v1332
      %v1334 = vmul.f32 %v638, %v1333
      %v1335 = vmul.f32 %v641, %v1333
      %v1336 = vmul.f32 %v646, %v1333
      %v1337 = vmul.f32 %v649, %v1333
      %v1338 = vmul.f32 %v654, %v1333
      %v1339 = vmul.f32 %v657, %v1333
      %v1340 = vmul.f32 %v662, %v1333
      %v1341 = vmul.f32 %v665, %v1333
      %v1342 = vmul.f32 %v670, %v1333
      %v1343 = vmul.f32 %v673, %v1333
      %v1344 = vmul.f32 %v678, %v1333
      %v1345 = vmul.f32 %v681, %v1333
      %v1346 = vmul.f32 %v686, %v1333
      %v1347 = vmul.f32 %v689, %v1333
      %v1348 = vmul.f32 %v1086, %v1333
      %v1349 = vmul.f32 %v1087, %v1333
      %v1350 = vadd.f32 %v1314, %v1334
      %v1351 = vadd.f32 %v1315, %v1335
      %v1352 = vadd.f32 %v1316, %v1336
      %v1353 = vadd.f32 %v1317, %v1337
      %v1354 = vadd.f32 %v1318, %v1338
      %v1355 = vadd.f32 %v1319, %v1339
      %v1356 = vadd.f32 %v1320, %v1340
      %v1357 = vadd.f32 %v1321, %v1341
      %v1358 = vadd.f32 %v1322, %v1342
      %v1359 = vadd.f32 %v1323, %v1343
      %v1360 = vadd.f32 %v1324, %v1344
      %v1361 = vadd.f32 %v1325, %v1345
      %v1362 = vadd.f32 %v1326, %v1346
      %v1363 = vadd.f32 %v1327, %v1347
      %v1364 = vadd.f32 %v1328, %v1348
      %v1365 = vadd.f32 %v1329, %v1349
      %1366 = vst.msk [vmem:[#allocation2 + $0x8] sm:$0xff] %vm570, %v1166
      %1367 = vst.msk [vmem:[#allocation2 + $0x10] sm:$0xff] %vm570, %v1167
      %1368 = vst.msk [vmem:[#allocation2 + $0x18] sm:$0xff] %vm570, %v1168
      %1369 = vst.msk [vmem:[#allocation2 + $0x20] sm:$0xff] %vm570, %v1169
      %1370 = vst.msk [vmem:[#allocation2 + $0x28] sm:$0xff] %vm570, %v1170
      %1371 = vst.msk [vmem:[#allocation2 + $0x30] sm:$0xff] %vm570, %v1171
      %1372 = vst.msk [vmem:[#allocation2 + $0x38] sm:$0xff] %vm570, %v1172
      %1373 = vst.msk [vmem:[#allocation2 + $0x40] sm:$0xff] %vm570, %v1173
      %1374 = vst.msk [vmem:[#allocation2 + $0x48] sm:$0xff] %vm570, %v1174
      %1375 = vst.msk [vmem:[#allocation2 + $0x50] sm:$0xff] %vm570, %v1175
      %1376 = vst.msk [vmem:[#allocation2 + $0x58] sm:$0xff] %vm570, %v1176
      %1377 = vst.msk [vmem:[#allocation2 + $0x60] sm:$0xff] %vm570, %v1177
      %1378 = vst.msk [vmem:[#allocation2 + $0x68] sm:$0xff] %vm570, %v1178
      %1379 = vst.msk [vmem:[#allocation2 + $0x70] sm:$0xff] %vm570, %v1179
      %1380 = vst.msk [vmem:[#allocation2 + $0x78] sm:$0xff] %vm570, %v1180
      %1381 = vst.msk [vmem:[#allocation2 + $0x80] sm:$0xff] %vm570, %v1181
      %1382 = vst.msk [vmem:[#allocation3 + $0x8] sm:$0xff] %vm570, %v1350
      %1383 = vst.msk [vmem:[#allocation3 + $0x10] sm:$0xff] %vm570, %v1351
      %1384 = vst.msk [vmem:[#allocation3 + $0x18] sm:$0xff] %vm570, %v1352
      %1385 = vst.msk [vmem:[#allocation3 + $0x20] sm:$0xff] %vm570, %v1353
      %1386 = vst.msk [vmem:[#allocation3 + $0x28] sm:$0xff] %vm570, %v1354
      %1387 = vst.msk [vmem:[#allocation3 + $0x30] sm:$0xff] %vm570, %v1355
      %1388 = vst.msk [vmem:[#allocation3 + $0x38] sm:$0xff] %vm570, %v1356
      %1389 = vst.msk [vmem:[#allocation3 + $0x40] sm:$0xff] %vm570, %v1357
      %1390 = vst.msk [vmem:[#allocation3 + $0x48] sm:$0xff] %vm570, %v1358
      %1391 = vst.msk [vmem:[#allocation3 + $0x50] sm:$0xff] %vm570, %v1359
      %1392 = vst.msk [vmem:[#allocation3 + $0x58] sm:$0xff] %vm570, %v1360
      %1393 = vst.msk [vmem:[#allocation3 + $0x60] sm:$0xff] %vm570, %v1361
      %1394 = vst.msk [vmem:[#allocation3 + $0x68] sm:$0xff] %vm570, %v1362
      %1395 = vst.msk [vmem:[#allocation3 + $0x70] sm:$0xff] %vm570, %v1363
      %1396 = vst.msk [vmem:[#allocation3 + $0x78] sm:$0xff] %vm570, %v1364
      %1397 = vst.msk [vmem:[#allocation3 + $0x80] sm:$0xff] %vm570, %v1365
      %v1398 = vld [vmem:[#allocation2 + $0x7] sm:$0xff]
      %v1399 = vld [vmem:[#allocation2 + $0xf] sm:$0xff]
      %v1400 = vld [vmem:[#allocation2 + $0x17] sm:$0xff]
      %v1401 = vld [vmem:[#allocation2 + $0x1f] sm:$0xff]
      %v1402 = vld [vmem:[#allocation2 + $0x27] sm:$0xff]
      %v1403 = vld [vmem:[#allocation2 + $0x2f] sm:$0xff]
      %v1404 = vld [vmem:[#allocation2 + $0x37] sm:$0xff]
      %v1405 = vld [vmem:[#allocation2 + $0x3f] sm:$0xff]
      %v1406 = vld [vmem:[#allocation2 + $0x47] sm:$0xff]
      %v1407 = vld [vmem:[#allocation2 + $0x4f] sm:$0xff]
      %v1408 = vld [vmem:[#allocation2 + $0x57] sm:$0xff]
      %v1409 = vld [vmem:[#allocation2 + $0x5f] sm:$0xff]
      %v1410 = vld [vmem:[#allocation2 + $0x67] sm:$0xff]
      %v1411 = vld [vmem:[#allocation2 + $0x6f] sm:$0xff]
      %v1412 = vld [vmem:[#allocation2 + $0x77] sm:$0xff]
      %v1413 = vld [vmem:[#allocation2 + $0x7f] sm:$0xff]
      %v1414 = vld [vmem:[#allocation3 + $0x9] sm:$0xff]
      %v1415 = vld [vmem:[#allocation3 + $0x11] sm:$0xff]
      %v1416 = vld [vmem:[#allocation3 + $0x19] sm:$0xff]
      %v1417 = vld [vmem:[#allocation3 + $0x21] sm:$0xff]
      %v1418 = vld [vmem:[#allocation3 + $0x29] sm:$0xff]
      %v1419 = vld [vmem:[#allocation3 + $0x31] sm:$0xff]
      %v1420 = vld [vmem:[#allocation3 + $0x39] sm:$0xff]
      %v1421 = vld [vmem:[#allocation3 + $0x41] sm:$0xff]
      %v1422 = vld [vmem:[#allocation3 + $0x49] sm:$0xff]
      %v1423 = vld [vmem:[#allocation3 + $0x51] sm:$0xff]
      %v1424 = vld [vmem:[#allocation3 + $0x59] sm:$0xff]
      %v1425 = vld [vmem:[#allocation3 + $0x61] sm:$0xff]
      %v1426 = vld [vmem:[#allocation3 + $0x69] sm:$0xff]
      %v1427 = vld [vmem:[#allocation3 + $0x71] sm:$0xff]
      %v1428 = vld [vmem:[#allocation3 + $0x79] sm:$0xff]
      %v1429 = vld [vmem:[#allocation3 + $0x81] sm:$0xff]
      %v1430 = vlaneseq
      %v1431 = vshrl.u32 %v1430, 7
      %v1432 = vadd.s32 %v1431, 8
      %v1433 = vadd.s32 %v1431, 16
      %v1434 = vadd.s32 %v1431, 24
      %v1435 = vadd.s32 %v1431, 32
      %v1436 = vadd.s32 %v1431, 40
      %v1437 = vadd.s32 %v1431, 48
      %v1438 = vadd.s32 %v1431, 56
      %v1439 = vadd.s32 %v1431, 64
      %v1440 = vadd.s32 %v1431, 72
      %v1441 = vadd.s32 %v1431, 80
      %v1442 = vadd.s32 %v1431, 88
      %v1443 = vadd.s32 %v1431, 96
      %v1444 = vadd.s32 %v1431, 104
      %v1445 = vadd.s32 %v1431, 112
      %v1446 = vadd.s32 %v1431, 120
      %v1447 = vand.u32 %v1431, 15
      %v1448 = vand.u32 %v1432, 15
      %v1449 = vand.u32 %v1433, 15
      %v1450 = vand.u32 %v1434, 15
      %v1451 = vand.u32 %v1435, 15
      %v1452 = vand.u32 %v1436, 15
      %v1453 = vand.u32 %v1437, 15
      %v1454 = vand.u32 %v1438, 15
      %v1455 = vand.u32 %v1439, 15
      %v1456 = vand.u32 %v1440, 15
      %v1457 = vand.u32 %v1441, 15
      %v1458 = vand.u32 %v1442, 15
      %v1459 = vand.u32 %v1443, 15
      %v1460 = vand.u32 %v1444, 15
      %v1461 = vand.u32 %v1445, 15
      %v1462 = vand.u32 %v1446, 15
      %vm1463 = vcmp.ne.s32.totalorder %v1447, 0
      %vm1464 = vcmp.ne.s32.totalorder %v1448, 0
      %vm1465 = vcmp.ne.s32.totalorder %v1449, 0
      %vm1466 = vcmp.ne.s32.totalorder %v1450, 0
      %vm1467 = vcmp.ne.s32.totalorder %v1451, 0
      %vm1468 = vcmp.ne.s32.totalorder %v1452, 0
      %vm1469 = vcmp.ne.s32.totalorder %v1453, 0
      %vm1470 = vcmp.ne.s32.totalorder %v1454, 0
      %vm1471 = vcmp.ne.s32.totalorder %v1455, 0
      %vm1472 = vcmp.ne.s32.totalorder %v1456, 0
      %vm1473 = vcmp.ne.s32.totalorder %v1457, 0
      %vm1474 = vcmp.ne.s32.totalorder %v1458, 0
      %vm1475 = vcmp.ne.s32.totalorder %v1459, 0
      %vm1476 = vcmp.ne.s32.totalorder %v1460, 0
      %vm1477 = vcmp.ne.s32.totalorder %v1461, 0
      %vm1478 = vcmp.ne.s32.totalorder %v1462, 0
      %v1479 = vsel %vm1463, %v1398, 0.0
      %v1480 = vsel %vm1464, %v1399, 0.0
      %v1481 = vsel %vm1465, %v1400, 0.0
      %v1482 = vsel %vm1466, %v1401, 0.0
      %v1483 = vsel %vm1467, %v1402, 0.0
      %v1484 = vsel %vm1468, %v1403, 0.0
      %v1485 = vsel %vm1469, %v1404, 0.0
      %v1486 = vsel %vm1470, %v1405, 0.0
      %v1487 = vsel %vm1471, %v1406, 0.0
      %v1488 = vsel %vm1472, %v1407, 0.0
      %v1489 = vsel %vm1473, %v1408, 0.0
      %v1490 = vsel %vm1474, %v1409, 0.0
      %v1491 = vsel %vm1475, %v1410, 0.0
      %v1492 = vsel %vm1476, %v1411, 0.0
      %v1493 = vsel %vm1477, %v1412, 0.0
      %v1494 = vsel %vm1478, %v1413, 0.0
      %v1495 = vadd.f32 %v1258, %v1479
      %v1496 = vadd.f32 %v1259, %v1480
      %v1497 = vadd.f32 %v1260, %v1481
      %v1498 = vadd.f32 %v1261, %v1482
      %v1499 = vadd.f32 %v1262, %v1483
      %v1500 = vadd.f32 %v1263, %v1484
      %v1501 = vadd.f32 %v1264, %v1485
      %v1502 = vadd.f32 %v1265, %v1486
      %v1503 = vadd.f32 %v1266, %v1487
      %v1504 = vadd.f32 %v1267, %v1488
      %v1505 = vadd.f32 %v1268, %v1489
      %v1506 = vadd.f32 %v1269, %v1490
      %v1507 = vadd.f32 %v1270, %v1491
      %v1508 = vadd.f32 %v1271, %v1492
      %v1509 = vadd.f32 %v1272, %v1493
      %v1510 = vadd.f32 %v1273, %v1494
      %vm1511 = vcmp.ne.s32.totalorder %v1447, 15
      %vm1512 = vcmp.ne.s32.totalorder %v1448, 15
      %vm1513 = vcmp.ne.s32.totalorder %v1449, 15
      %vm1514 = vcmp.ne.s32.totalorder %v1450, 15
      %vm1515 = vcmp.ne.s32.totalorder %v1451, 15
      %vm1516 = vcmp.ne.s32.totalorder %v1452, 15
      %vm1517 = vcmp.ne.s32.totalorder %v1453, 15
      %vm1518 = vcmp.ne.s32.totalorder %v1454, 15
      %vm1519 = vcmp.ne.s32.totalorder %v1455, 15
      %vm1520 = vcmp.ne.s32.totalorder %v1456, 15
      %vm1521 = vcmp.ne.s32.totalorder %v1457, 15
      %vm1522 = vcmp.ne.s32.totalorder %v1458, 15
      %vm1523 = vcmp.ne.s32.totalorder %v1459, 15
      %vm1524 = vcmp.ne.s32.totalorder %v1460, 15
      %vm1525 = vcmp.ne.s32.totalorder %v1461, 15
      %vm1526 = vcmp.ne.s32.totalorder %v1462, 15
      %v1527 = vsel %vm1511, %v1414, 0.0
      %v1528 = vsel %vm1512, %v1415, 0.0
      %v1529 = vsel %vm1513, %v1416, 0.0
      %v1530 = vsel %vm1514, %v1417, 0.0
      %v1531 = vsel %vm1515, %v1418, 0.0
      %v1532 = vsel %vm1516, %v1419, 0.0
      %v1533 = vsel %vm1517, %v1420, 0.0
      %v1534 = vsel %vm1518, %v1421, 0.0
      %v1535 = vsel %vm1519, %v1422, 0.0
      %v1536 = vsel %vm1520, %v1423, 0.0
      %v1537 = vsel %vm1521, %v1424, 0.0
      %v1538 = vsel %vm1522, %v1425, 0.0
      %v1539 = vsel %vm1523, %v1426, 0.0
      %v1540 = vsel %vm1524, %v1427, 0.0
      %v1541 = vsel %vm1525, %v1428, 0.0
      %v1542 = vsel %vm1526, %v1429, 0.0
      %v1543 = vadd.f32 %v1495, %v1527
      %v1544 = vadd.f32 %v1496, %v1528
      %v1545 = vadd.f32 %v1497, %v1529
      %v1546 = vadd.f32 %v1498, %v1530
      %v1547 = vadd.f32 %v1499, %v1531
      %v1548 = vadd.f32 %v1500, %v1532
      %v1549 = vadd.f32 %v1501, %v1533
      %v1550 = vadd.f32 %v1502, %v1534
      %v1551 = vadd.f32 %v1503, %v1535
      %v1552 = vadd.f32 %v1504, %v1536
      %v1553 = vadd.f32 %v1505, %v1537
      %v1554 = vadd.f32 %v1506, %v1538
      %v1555 = vadd.f32 %v1507, %v1539
      %v1556 = vadd.f32 %v1508, %v1540
      %v1557 = vadd.f32 %v1509, %v1541
      %v1558 = vadd.f32 %v1510, %v1542
      %v1559 = vld [vmem:[%s6] sm:$0x1]
      %v1561 = vlaneseq
      %v1562 = vshrl.u32 %v1561, 7
      %v1563 = vsub.s32 0, %v1562
      %v1564 = vrot.slane %v1559, %v1563
      %v1566 = vadd.f32 %v1543, %v1564
      %v1567 = vadd.f32 %v1544, %v1564
      %v1568 = vadd.f32 %v1545, %v1564
      %v1569 = vadd.f32 %v1546, %v1564
      %v1570 = vadd.f32 %v1547, %v1564
      %v1571 = vadd.f32 %v1548, %v1564
      %v1572 = vadd.f32 %v1549, %v1564
      %v1573 = vadd.f32 %v1550, %v1564
      %v1574 = vadd.f32 %v1551, %v1564
      %v1575 = vadd.f32 %v1552, %v1564
      %v1576 = vadd.f32 %v1553, %v1564
      %v1577 = vadd.f32 %v1554, %v1564
      %v1578 = vadd.f32 %v1555, %v1564
      %v1579 = vadd.f32 %v1556, %v1564
      %v1580 = vadd.f32 %v1557, %v1564
      %v1581 = vadd.f32 %v1558, %v1564
      %v1582 = vunpack.c.l.bf16 %v498
      %v1583 = vunpack.c.l.bf16 %v499
      %v1584 = vunpack.c.l.bf16 %v500
      %v1585 = vunpack.c.l.bf16 %v501
      %v1586 = vunpack.c.l.bf16 %v502
      %v1587 = vunpack.c.l.bf16 %v503
      %v1588 = vunpack.c.l.bf16 %v504
      %v1589 = vunpack.c.l.bf16 %v505
      %v1590 = vunpack.c.l.bf16 %v506
      %v1591 = vunpack.c.l.bf16 %v507
      %v1592 = vunpack.c.l.bf16 %v508
      %v1593 = vunpack.c.l.bf16 %v509
      %v1594 = vunpack.c.l.bf16 %v510
      %v1595 = vunpack.c.l.bf16 %v511
      %v1596 = vunpack.c.l.bf16 %v512
      %v1597 = vunpack.c.l.bf16 %v513
      %v1598 = vadd.f32 %v1566, %v1582
      %v1599 = vadd.f32 %v1567, %v1583
      %v1600 = vadd.f32 %v1568, %v1584
      %v1601 = vadd.f32 %v1569, %v1585
      %v1602 = vadd.f32 %v1570, %v1586
      %v1603 = vadd.f32 %v1571, %v1587
      %v1604 = vadd.f32 %v1572, %v1588
      %v1605 = vadd.f32 %v1573, %v1589
      %v1606 = vadd.f32 %v1574, %v1590
      %v1607 = vadd.f32 %v1575, %v1591
      %v1608 = vadd.f32 %v1576, %v1592
      %v1609 = vadd.f32 %v1577, %v1593
      %v1610 = vadd.f32 %v1578, %v1594
      %v1611 = vadd.f32 %v1579, %v1595
      %v1612 = vadd.f32 %v1580, %v1596
      %v1613 = vadd.f32 %v1581, %v1597
      %v1614 = vmul.f32 %v1598, 0.5
      %v1615 = vmul.f32 %v1599, 0.5
      %v1616 = vmul.f32 %v1600, 0.5
      %v1617 = vmul.f32 %v1601, 0.5
      %v1618 = vmul.f32 %v1602, 0.5
      %v1619 = vmul.f32 %v1603, 0.5
      %v1620 = vmul.f32 %v1604, 0.5
      %v1621 = vmul.f32 %v1605, 0.5
      %v1622 = vmul.f32 %v1606, 0.5
      %v1623 = vmul.f32 %v1607, 0.5
      %v1624 = vmul.f32 %v1608, 0.5
      %v1625 = vmul.f32 %v1609, 0.5
      %v1626 = vmul.f32 %v1610, 0.5
      %v1627 = vmul.f32 %v1611, 0.5
      %v1628 = vmul.f32 %v1612, 0.5
      %v1629 = vmul.f32 %v1613, 0.5
      %v1630 = vmul.f32 %v1598, 0.044715
      %v1631 = vmul.f32 %v1599, 0.044715
      %v1632 = vmul.f32 %v1600, 0.044715
      %v1633 = vmul.f32 %v1601, 0.044715
      %v1634 = vmul.f32 %v1602, 0.044715
      %v1635 = vmul.f32 %v1603, 0.044715
      %v1636 = vmul.f32 %v1604, 0.044715
      %v1637 = vmul.f32 %v1605, 0.044715
      %v1638 = vmul.f32 %v1606, 0.044715
      %v1639 = vmul.f32 %v1607, 0.044715
      %v1640 = vmul.f32 %v1608, 0.044715
      %v1641 = vmul.f32 %v1609, 0.044715
      %v1642 = vmul.f32 %v1610, 0.044715
      %v1643 = vmul.f32 %v1611, 0.044715
      %v1644 = vmul.f32 %v1612, 0.044715
      %v1645 = vmul.f32 %v1613, 0.044715
      %v1646 = vmul.f32 %v1630, %v1598
      %v1647 = vmul.f32 %v1631, %v1599
      %v1648 = vmul.f32 %v1632, %v1600
      %v1649 = vmul.f32 %v1633, %v1601
      %v1650 = vmul.f32 %v1634, %v1602
      %v1651 = vmul.f32 %v1635, %v1603
      %v1652 = vmul.f32 %v1636, %v1604
      %v1653 = vmul.f32 %v1637, %v1605
      %v1654 = vmul.f32 %v1638, %v1606
      %v1655 = vmul.f32 %v1639, %v1607
      %v1656 = vmul.f32 %v1640, %v1608
      %v1657 = vmul.f32 %v1641, %v1609
      %v1658 = vmul.f32 %v1642, %v1610
      %v1659 = vmul.f32 %v1643, %v1611
      %v1660 = vmul.f32 %v1644, %v1612
      %v1661 = vmul.f32 %v1645, %v1613
      %v1662 = vmul.f32 %v1646, %v1598
      %v1663 = vmul.f32 %v1647, %v1599
      %v1664 = vmul.f32 %v1648, %v1600
      %v1665 = vmul.f32 %v1649, %v1601
      %v1666 = vmul.f32 %v1650, %v1602
      %v1667 = vmul.f32 %v1651, %v1603
      %v1668 = vmul.f32 %v1652, %v1604
      %v1669 = vmul.f32 %v1653, %v1605
      %v1670 = vmul.f32 %v1654, %v1606
      %v1671 = vmul.f32 %v1655, %v1607
      %v1672 = vmul.f32 %v1656, %v1608
      %v1673 = vmul.f32 %v1657, %v1609
      %v1674 = vmul.f32 %v1658, %v1610
      %v1675 = vmul.f32 %v1659, %v1611
      %v1676 = vmul.f32 %v1660, %v1612
      %v1677 = vmul.f32 %v1661, %v1613
      %v1678 = vadd.f32 %v1598, %v1662
      %v1679 = vadd.f32 %v1599, %v1663
      %v1680 = vadd.f32 %v1600, %v1664
      %v1681 = vadd.f32 %v1601, %v1665
      %v1682 = vadd.f32 %v1602, %v1666
      %v1683 = vadd.f32 %v1603, %v1667
      %v1684 = vadd.f32 %v1604, %v1668
      %v1685 = vadd.f32 %v1605, %v1669
      %v1686 = vadd.f32 %v1606, %v1670
      %v1687 = vadd.f32 %v1607, %v1671
      %v1688 = vadd.f32 %v1608, %v1672
      %v1689 = vadd.f32 %v1609, %v1673
      %v1690 = vadd.f32 %v1610, %v1674
      %v1691 = vadd.f32 %v1611, %v1675
      %v1692 = vadd.f32 %v1612, %v1676
      %v1693 = vadd.f32 %v1613, %v1677
      %v1694 = vmul.f32 %v1678, 0.7978846
      %v1695 = vmul.f32 %v1679, 0.7978846
      %v1696 = vmul.f32 %v1680, 0.7978846
      %v1697 = vmul.f32 %v1681, 0.7978846
      %v1698 = vmul.f32 %v1682, 0.7978846
      %v1699 = vmul.f32 %v1683, 0.7978846
      %v1700 = vmul.f32 %v1684, 0.7978846
      %v1701 = vmul.f32 %v1685, 0.7978846
      %v1702 = vmul.f32 %v1686, 0.7978846
      %v1703 = vmul.f32 %v1687, 0.7978846
      %v1704 = vmul.f32 %v1688, 0.7978846
      %v1705 = vmul.f32 %v1689, 0.7978846
      %v1706 = vmul.f32 %v1690, 0.7978846
      %v1707 = vmul.f32 %v1691, 0.7978846
      %v1708 = vmul.f32 %v1692, 0.7978846
      %v1709 = vmul.f32 %v1693, 0.7978846
      %v1710 = vtanh.pop %v1694
      %v1711 = vtanh.pop %v1695
      %v1712 = vtanh.pop %v1696
      %v1713 = vtanh.pop %v1697
      %v1714 = vtanh.pop %v1698
      %v1715 = vtanh.pop %v1699
      %v1716 = vtanh.pop %v1700
      %v1717 = vtanh.pop %v1701
      %v1718 = vtanh.pop %v1702
      %v1719 = vtanh.pop %v1703
      %v1720 = vtanh.pop %v1704
      %v1721 = vtanh.pop %v1705
      %v1722 = vtanh.pop %v1706
      %v1723 = vtanh.pop %v1707
      %v1724 = vtanh.pop %v1708
      %v1725 = vtanh.pop %v1709
      %v1726 = vadd.f32 %v1710, 1.0
      %v1727 = vadd.f32 %v1711, 1.0
      %v1728 = vadd.f32 %v1712, 1.0
      %v1729 = vadd.f32 %v1713, 1.0
      %v1730 = vadd.f32 %v1714, 1.0
      %v1731 = vadd.f32 %v1715, 1.0
      %v1732 = vadd.f32 %v1716, 1.0
      %v1733 = vadd.f32 %v1717, 1.0
      %v1734 = vadd.f32 %v1718, 1.0
      %v1735 = vadd.f32 %v1719, 1.0
      %v1736 = vadd.f32 %v1720, 1.0
      %v1737 = vadd.f32 %v1721, 1.0
      %v1738 = vadd.f32 %v1722, 1.0
      %v1739 = vadd.f32 %v1723, 1.0
      %v1740 = vadd.f32 %v1724, 1.0
      %v1741 = vadd.f32 %v1725, 1.0
      %v1742 = vmul.f32 %v1614, %v1726
      %v1743 = vmul.f32 %v1615, %v1727
      %v1744 = vmul.f32 %v1616, %v1728
      %v1745 = vmul.f32 %v1617, %v1729
      %v1746 = vmul.f32 %v1618, %v1730
      %v1747 = vmul.f32 %v1619, %v1731
      %v1748 = vmul.f32 %v1620, %v1732
      %v1749 = vmul.f32 %v1621, %v1733
      %v1750 = vmul.f32 %v1622, %v1734
      %v1751 = vmul.f32 %v1623, %v1735
      %v1752 = vmul.f32 %v1624, %v1736
      %v1753 = vmul.f32 %v1625, %v1737
      %v1754 = vmul.f32 %v1626, %v1738
      %v1755 = vmul.f32 %v1627, %v1739
      %v1756 = vmul.f32 %v1628, %v1740
      %v1757 = vmul.f32 %v1629, %v1741
      %v1758 = vpack.c.bf16 %v1743, %v1742
      %v1759 = vpack.c.bf16 %v1745, %v1744
      %v1760 = vpack.c.bf16 %v1747, %v1746
      %v1761 = vpack.c.bf16 %v1749, %v1748
      %v1762 = vpack.c.bf16 %v1751, %v1750
      %v1763 = vpack.c.bf16 %v1753, %v1752
      %v1764 = vpack.c.bf16 %v1755, %v1754
      %v1765 = vpack.c.bf16 %v1757, %v1756
      %v1774 = vunpack.c.l.b16 %v1758
      %v1775 = vunpack.c.h.b16 %v1758
      %v1776 = vunpack.c.l.b16 %v1759
      %v1777 = vunpack.c.h.b16 %v1759
      %v1778 = vunpack.c.l.b16 %v1760
      %v1779 = vunpack.c.h.b16 %v1760
      %v1780 = vunpack.c.l.b16 %v1761
      %v1781 = vunpack.c.h.b16 %v1761
      %v1782 = vunpack.c.l.b16 %v1762
      %v1783 = vunpack.c.h.b16 %v1762
      %v1784 = vunpack.c.l.b16 %v1763
      %v1785 = vunpack.c.h.b16 %v1763
      %v1786 = vunpack.c.l.b16 %v1764
      %v1787 = vunpack.c.h.b16 %v1764
      %v1788 = vunpack.c.l.b16 %v1765
      %v1789 = vunpack.c.h.b16 %v1765
      %v1790 = vpack.c.b16 %v1774, %v1774
      %v1791 = vpack.c.b16 %v1775, %v1775
      %v1792 = vpack.c.b16 %v1776, %v1776
      %v1793 = vpack.c.b16 %v1777, %v1777
      %v1794 = vpack.c.b16 %v1778, %v1778
      %v1795 = vpack.c.b16 %v1779, %v1779
      %v1796 = vpack.c.b16 %v1780, %v1780
      %v1797 = vpack.c.b16 %v1781, %v1781
      %v1798 = vpack.c.b16 %v1782, %v1782
      %v1799 = vpack.c.b16 %v1783, %v1783
      %v1800 = vpack.c.b16 %v1784, %v1784
      %v1801 = vpack.c.b16 %v1785, %v1785
      %v1802 = vpack.c.b16 %v1786, %v1786
      %v1803 = vpack.c.b16 %v1787, %v1787
      %v1804 = vpack.c.b16 %v1788, %v1788
      %v1805 = vpack.c.b16 %v1789, %v1789
      %vm1822 = vcmask 257024
      %1823 = vst.msk [vmem:[%s495] sm:$0xf] %vm1822, %v1790
      %1824 = vst.msk [vmem:[%s495 + $0x4] sm:$0xf] %vm1822, %v1791
      %1825 = vst.msk [vmem:[%s495 + $0x8] sm:$0xf] %vm1822, %v1792
      %1826 = vst.msk [vmem:[%s495 + $0xc] sm:$0xf] %vm1822, %v1793
      %1827 = vst.msk [vmem:[%s495 + $0x10] sm:$0xf] %vm1822, %v1794
      %1828 = vst.msk [vmem:[%s495 + $0x14] sm:$0xf] %vm1822, %v1795
      %1829 = vst.msk [vmem:[%s495 + $0x18] sm:$0xf] %vm1822, %v1796
      %1830 = vst.msk [vmem:[%s495 + $0x1c] sm:$0xf] %vm1822, %v1797
      %1831 = vst.msk [vmem:[%s495 + $0x20] sm:$0xf] %vm1822, %v1798
      %1832 = vst.msk [vmem:[%s495 + $0x24] sm:$0xf] %vm1822, %v1799
      %1833 = vst.msk [vmem:[%s495 + $0x28] sm:$0xf] %vm1822, %v1800
      %1834 = vst.msk [vmem:[%s495 + $0x2c] sm:$0xf] %vm1822, %v1801
      %1835 = vst.msk [vmem:[%s495 + $0x30] sm:$0xf] %vm1822, %v1802
      %1836 = vst.msk [vmem:[%s495 + $0x34] sm:$0xf] %vm1822, %v1803
      %1837 = vst.msk [vmem:[%s495 + $0x38] sm:$0xf] %vm1822, %v1804
      %1838 = vst.msk [vmem:[%s495 + $0x3c] sm:$0xf] %vm1822, %v1805
      %s1839 = smul.u32 16, %s25
      %p1840 = scmp.lt.s32.totalorder %s24, 0
      %s1841 = scalar_select %p1840, %s24, 0
      %p1842 = scmp.lt.s32.totalorder %s1839, 31
      %s1843 = scalar_select %p1842, %s1839, 31
      %s1844 = smul.addr %s1841, 32
      %s1845 = sadd.s32 %s1843, %s1844
      %s1846 = smul.addr %s1845, 4
      %s1847 = scalar_lea.vmem %s7, %s1846
      %s1848 = smul.u32 16, %s25
      %p1849 = scmp.lt.s32.totalorder %s24, 0
      %s1850 = scalar_select %p1849, %s24, 0
      %p1851 = scmp.lt.s32.totalorder %s1848, 31
      %s1852 = scalar_select %p1851, %s1848, 31
      %s1853 = smul.addr %s1850, 32
      %s1854 = sadd.s32 %s1852, %s1853
      %s1855 = smul.addr %s1854, 4
      %s1856 = scalar_lea.vmem %s8, %s1855
      // Predicated region
      $region49: #{_fused_stage.1} parent=47 // pred_check
        %p1857 = pneg %p236
      $region50: #{_fused_stage.1} parent=47 // pred_check_branch
        %1859 = sbr.rel (%p1857) target = $region52
      $region51: #{_fused_stage.1} parent=47 // pred_region
        %s1860 = smul.u32 16, %s25
      $region52: #{_fused_stage.1} parent=47 // pred_fallthru
        _
      // Predicated region
      $region53: #{_fused_stage.1} parent=47 // pred_check
        %p1861 = pneg %p264
      $region54: #{_fused_stage.1} parent=47 // pred_check_branch
        %1863 = sbr.rel (%p1861) target = $region56
      $region55: #{_fused_stage.1} parent=47 // pred_region
        %s1864 = smul.u32 16, %s25
      $region56: #{_fused_stage.1} parent=47 // pred_fallthru
        _
    $region48: #{_fused_stage.1} parent=5 // pred_fallthru
      _
    %p1865 = scmp.le.s32.totalorder 2, %s15
    // Predicated region
    $region57: #{_fused_stage.1} parent=5 // pred_check
      %p1866 = pneg %p1865
    $region58: #{_fused_stage.1} parent=5 // pred_check_branch
      %1868 = sbr.rel (%p1866) target = $region60
    $region59: #{_fused_stage.1} parent=5 // pred_region
      %s1869 = ssub.s32 %s15, 2
      // Predicated region
      $region61: #{_fused_stage.1} parent=59 // pred_check
        %p1870 = pneg %p242
      $region62: #{_fused_stage.1} parent=59 // pred_check_branch
        %1872 = sbr.rel (%p1870) target = $region64
      $region63: #{_fused_stage.1} parent=59 // pred_region
        %s1873 = smul.u32 16, %s27
        %p1874 = scmp.lt.s32.totalorder %s26, 0
        %s1875 = scalar_select %p1874, %s26, 0
        %p1876 = scmp.lt.s32.totalorder %s1873, 31
        %s1877 = scalar_select %p1876, %s1873, 31
        %s1878 = smul.addr %s1875, 32
        %s1879 = sadd.s32 %s1877, %s1878
        %s1880 = smul.addr %s1879, 4
        %s1881 = scalar_lea.vmem %s7, %s1880
      $region64: #{_fused_stage.1} parent=59 // pred_fallthru
        _
      // Predicated region
      $region65: #{_fused_stage.1} parent=59 // pred_check
        %p1882 = pneg %p270
      $region66: #{_fused_stage.1} parent=59 // pred_check_branch
        %1884 = sbr.rel (%p1882) target = $region68
      $region67: #{_fused_stage.1} parent=59 // pred_region
        %s1885 = smul.u32 16, %s27
        %p1886 = scmp.lt.s32.totalorder %s26, 0
        %s1887 = scalar_select %p1886, %s26, 0
        %p1888 = scmp.lt.s32.totalorder %s1885, 31
        %s1889 = scalar_select %p1888, %s1885, 31
        %s1890 = smul.addr %s1887, 32
        %s1891 = sadd.s32 %s1889, %s1890
        %s1892 = smul.addr %s1891, 4
        %s1893 = scalar_lea.vmem %s8, %s1892
      $region68: #{_fused_stage.1} parent=59 // pred_fallthru
        _
    $region60: #{_fused_stage.1} parent=5 // pred_fallthru
      _
  $region6: #{_fused_stage.1} parent=0 // loop_footer
    %s19 = sadd.s32 1, %s15
  $region7: #{_fused_stage.1} parent=0 // loop_footer_branch
    %14 = sbr.rel target = $region3
  $region8: #{_fused_stage.1} parent=0 // loop_exit
    _

</llo_original>
